<compile_context>
chip_gen: v7x
topology: tpu7x:2x2x1
jax: 0.10.0
libtpu: 0.0.40
codegen_flags: <defaults>
</compile_context>

<pallas_src>
import jax
import jax.numpy as jnp
from jax import lax
from jax.experimental import pallas as pl
from jax.experimental.pallas import tpu as pltpu

KSIZE = 7
PAD = 3


def _foreach_row(n_rows, body, *, static_threshold=128, unroll=4):
    """Run body(h) for h in [0, n_rows).

    Small n_rows: static Python unroll -> all lane offsets are compile-time
    constants (no dynamic masked stores).  Large n_rows: lax.fori_loop with a
    small unroll factor to bound live ranges and compile size.
    """
    if n_rows <= static_threshold:
        for h in range(n_rows):
            body(h)
    else:
        def wrapped(h, carry):
            body(h)
            return carry
        lax.fori_loop(0, n_rows, wrapped, 0, unroll=unroll)


def _make_kernel(C, H, W):
    HP, WP = H + 2 * PAD, W + 2 * PAD
    HWP = H * WP                    # lane extent covering all H output rows (stride WP)
    LW = HWP + (KSIZE - 1)          # matmul RHS width: +6 so the kw lane shifts stay in-bounds
    XW = HP * WP + (KSIZE - 1)      # xpad lane width: +6 slack so the kh=6 slice fits
    HW = H * W

    def kernel(x_ref, w_ref, b_ref, out_ref, xpad_ref, convp_ref, attn_ref):
        # x_ref    : (1, C, HW)   VMEM f32   lane-dense input block (one image)
        # w_ref    : (7, 7, C)    VMEM bf16  w_ref[kh, kw, c] = weight[0, c, kh, kw]
        # b_ref    : (1,)         SMEM f32   conv bias (scalar)
        # out_ref  : (1, C, HW)   VMEM       lane-dense output block
        # xpad_ref : (C, XW)      VMEM bf16  zero-padded image, rows flattened along lanes
        # convp_ref: (1, HWP)     VMEM f32   sigmoid(conv) in the WP-strided (padded) layout
        # attn_ref : (1, HW)      VMEM f32   dense attention map

        # ---- zero ONLY the halo (data region is fully overwritten below) --------
        head = PAD * WP + PAD                       # top halo rows + left halo of row 0
        xpad_ref[:, 0:head] = jnp.zeros((C, head), jnp.bfloat16)
        tail = (PAD + H) * WP + PAD                 # bottom halo rows + slack tail
        xpad_ref[:, tail:XW] = jnp.zeros((C, XW - tail), jnp.bfloat16)

        gap0 = jnp.zeros((C, 2 * PAD), jnp.bfloat16)   # hoisted, not re-broadcast per row

        # ---- padding copy: data + 6-lane inter-row halo, one pass over the input -
        def copy_row(h):
            base = (PAD + h) * WP + PAD
            row = x_ref[0, :, pl.ds(h * W, W)].astype(jnp.bfloat16)   # (C, W)
            xpad_ref[:, pl.ds(base, W)] = row
            # right halo of row h + left halo of row h+1 (last one ends exactly at `tail`)
            xpad_ref[:, pl.ds(base + W, 2 * PAD)] = gap0
        _foreach_row(H, copy_row)

        # ---- 7x7 conv: 7 MXU matmuls (kh) + 7 lane-shifted adds (kw) -------------
        w_all = w_ref[...]                                   # (7, 7, C) bf16
        taps = jnp.zeros((KSIZE, LW), jnp.float32)
        for kh in range(KSIZE):
            rhs = xpad_ref[:, kh * WP:kh * WP + LW]          # (C, LW) bf16, static slice
            taps = taps + jnp.dot(w_all[kh], rhs,
                                  preferred_element_type=jnp.float32)   # (7_kw, LW)

        conv_p = jnp.full((1, HWP), b_ref[0], jnp.float32)   # bias broadcast, hoisted
        for kw in range(KSIZE):
            conv_p = conv_p + taps[kw:kw + 1, kw:kw + HWP]
        convp_ref[...] = jax.nn.sigmoid(conv_p)              # EUP; junk gap lanes are finite

        # ---- compact WP-strided rows -> dense (1, H*W) attention map -------------
        def compact_row(h):
            attn_ref[:, pl.ds(h * W, W)] = convp_ref[:, pl.ds(h * WP, W)]
        _foreach_row(H, compact_row)

        # ---- gate: full lane-dense elementwise multiply + dense store ------------
        out_ref[0] = (x_ref[0] * attn_ref[...]).astype(out_ref.dtype)

    return kernel, XW, HWP


@jax.jit
def spatial_attention(x, weight, bias):
    """Pallas TPU SpatialAttention: x * sigmoid(conv2d(x, weight, bias, padding=3)).

    x: (N, C, H, W) f32; weight: (1, C, 7, 7) f32; bias: (1,) f32.
    """
    N, C, H, W = x.shape
    HW = H * W

    kernel, XW, HWP = _make_kernel(C, H, W)

    # Metadata-only reshape: lane-dense (N, C, H*W) blocks, single HBM read/write.
    x_flat = x.reshape(N, C, HW)
    # (kh, kw, c) ordering; bf16 is the native MXU operand on all generations.
    w3 = jnp.transpose(weight[0], (1, 2, 0)).astype(jnp.bfloat16)   # (7, 7, C)
    b = bias.reshape(1).astype(jnp.float32)

    # TODO(synk): if N is large and W tiny, block several images per grid step
    # (lane-concatenate them in xpad) to further amortize the ~0.35 us/step overhead;
    # keep the grid >= 2 steps so both v7x TensorCores stay busy.
    out_flat = pl.pallas_call(
        kernel,
        out_shape=jax.ShapeDtypeStruct((N, C, HW), x.dtype),
        grid_spec=pltpu.PrefetchScalarGridSpec(
            num_scalar_prefetch=0,
            grid=(N,),
            in_specs=[
                pl.BlockSpec((1, C, HW), lambda n: (n, 0, 0)),
                pl.BlockSpec((KSIZE, KSIZE, C), lambda n: (0, 0, 0)),
                pl.BlockSpec(memory_space=pltpu.MemorySpace.SMEM),   # bias scalar
            ],
            out_specs=pl.BlockSpec((1, C, HW), lambda n: (n, 0, 0)),
            scratch_shapes=[
                pltpu.VMEM((C, XW), jnp.bfloat16),    # flat-lane padded image
                pltpu.VMEM((1, HWP), jnp.float32),    # WP-strided sigmoid map
                pltpu.VMEM((1, HW), jnp.float32),     # dense attention map
            ],
        ),
        compiler_params=pltpu.CompilerParams(
            dimension_semantics=("parallel",)),
    )(x_flat, w3, b)
    return out_flat.reshape(N, C, H, W)


def reference(x, weight, bias):
    conv = lax.conv_general_dilated(
        x, weight, window_strides=(1, 1), padding=((PAD, PAD), (PAD, PAD)),
        dimension_numbers=("NCHW", "OIHW", "NCHW"),
        precision=lax.Precision.HIGHEST)
    attn = jax.nn.sigmoid(conv + bias.reshape(1, 1, 1, 1))
    return x * attn


if __name__ == "__main__":
    key = jax.random.PRNGKey(0)
    kx, kw_, kb = jax.random.split(key, 3)

    N, C, H, W = 2, 4, 16, 16
    x = jax.random.normal(kx, (N, C, H, W), dtype=jnp.float32)

    # nn.Conv2d(C, 1, 7, padding=3)-shaped parameters, deterministic init.
    fan_in = C * KSIZE * KSIZE
    bound = 1.0 / (fan_in ** 0.5)
    weight = jax.random.uniform(kw_, (1, C, KSIZE, KSIZE), jnp.float32,
                                minval=-bound, maxval=bound)
    bias = jax.random.uniform(kb, (1,), jnp.float32, minval=-bound, maxval=bound)

    # Round test data to bf16-representable values so the bf16 MXU contraction is
    # exact (bf16*bf16 products land exactly in f32) and only f32 summation order
    # differs from the HIGHEST-precision reference conv.
    x = x.astype(jnp.bfloat16).astype(jnp.float32)
    weight = weight.astype(jnp.bfloat16).astype(jnp.float32)

    out = jax.block_until_ready(spatial_attention(x, weight, bias))
    ref = jax.block_until_ready(reference(x, weight, bias))

    assert out.shape == (N, C, H, W)
    max_err = jnp.max(jnp.abs(out - ref))
    assert jnp.allclose(out, ref, atol=1e-4, rtol=1e-4), f"mismatch vs reference: {max_err}"

    print("KERNEL_OK")
</pallas_src>

<mosaic_0001>
module attributes {stable_mosaic.version = 11 : i64} {
  func.func @kernel(%arg0: i32, %arg1: memref<1x4x256xf32, #tpu.memory_space<vmem>>, %arg2: memref<7x7x4xbf16, #tpu.memory_space<vmem>>, %arg3: memref<1xf32, #tpu.memory_space<smem>>, %arg4: memref<1x4x256xf32, #tpu.memory_space<vmem>>, %arg5: memref<4x490xbf16, #tpu.memory_space<vmem>>, %arg6: memref<1x352xf32, #tpu.memory_space<vmem>>, %arg7: memref<1x256xf32, #tpu.memory_space<vmem>>) attributes {dimension_semantics = [#tpu.dimension_semantics<parallel>], iteration_bounds = array<i64: 2>, scalar_prefetch = 0 : i64, scratch_operands = 3 : i64, tpu.core_type = #tpu.core_type<tc>, window_params = [{transform_indices = @transform_0, window_bounds = array<i64: 1, 4, 256>}, {pipeline_mode = #tpu.pipeline_mode<synchronous>, transform_indices = @transform_1, window_bounds = array<i64: 7, 7, 4>}, {transform_indices = @transform_2, window_bounds = array<i64: 1>}, {transform_indices = @transform_3, window_bounds = array<i64: 1, 4, 256>}]} {
    %cst = arith.constant 0.000000e+00 : bf16
    %0 = vector.broadcast %cst : bf16 to vector<4x69xbf16>
    %c0 = arith.constant 0 : index
    %c0_0 = arith.constant 0 : index
    %1 = vector.load %arg5[%c0, %c0_0] : memref<4x490xbf16, #tpu.memory_space<vmem>>, vector<4x69xbf16>
    tpu.vector_store %arg5[%c0, %c0_0], %0 {strides = array<i32>} : memref<4x490xbf16, #tpu.memory_space<vmem>>, vector<4x69xbf16>,
    %cst_1 = arith.constant 0.000000e+00 : bf16
    %2 = vector.broadcast %cst_1 : bf16 to vector<4x69xbf16>
    %c0_2 = arith.constant 0 : index
    %c421 = arith.constant 421 : index
    %3 = vector.load %arg5[%c0_2, %c421] : memref<4x490xbf16, #tpu.memory_space<vmem>>, vector<4x69xbf16>
    tpu.vector_store %arg5[%c0_2, %c421], %2 {strides = array<i32>} : memref<4x490xbf16, #tpu.memory_space<vmem>>, vector<4x69xbf16>,
    %cst_3 = arith.constant 0.000000e+00 : bf16
    %4 = vector.broadcast %cst_3 : bf16 to vector<4x6xbf16>
    %c0_4 = arith.constant 0 : index
    %c0_5 = arith.constant 0 : index
    %c0_6 = arith.constant 0 : index
    %5 = vector.load %arg1[%c0_4, %c0_5, %c0_6] : memref<1x4x256xf32, #tpu.memory_space<vmem>>, vector<1x4x16xf32>
    %6 = vector.shape_cast %5 : vector<1x4x16xf32> to vector<4x16xf32>
    %7 = arith.truncf %6 : vector<4x16xf32> to vector<4x16xbf16>
    %c0_7 = arith.constant 0 : index
    %c69 = arith.constant 69 : index
    %8 = vector.load %arg5[%c0_7, %c69] : memref<4x490xbf16, #tpu.memory_space<vmem>>, vector<4x16xbf16>
    tpu.vector_store %arg5[%c0_7, %c69], %7 {strides = array<i32>} : memref<4x490xbf16, #tpu.memory_space<vmem>>, vector<4x16xbf16>,
    %c0_8 = arith.constant 0 : index
    %c85 = arith.constant 85 : index
    %9 = vector.load %arg5[%c0_8, %c85] : memref<4x490xbf16, #tpu.memory_space<vmem>>, vector<4x6xbf16>
    tpu.vector_store %arg5[%c0_8, %c85], %4 {strides = array<i32>} : memref<4x490xbf16, #tpu.memory_space<vmem>>, vector<4x6xbf16>,
    %c0_9 = arith.constant 0 : index
    %c0_10 = arith.constant 0 : index
    %c16 = arith.constant 16 : index
    %10 = vector.load %arg1[%c0_9, %c0_10, %c16] : memref<1x4x256xf32, #tpu.memory_space<vmem>>, vector<1x4x16xf32>
    %11 = vector.shape_cast %10 : vector<1x4x16xf32> to vector<4x16xf32>
    %12 = arith.truncf %11 : vector<4x16xf32> to vector<4x16xbf16>
    %c0_11 = arith.constant 0 : index
    %c91 = arith.constant 91 : index
    %13 = vector.load %arg5[%c0_11, %c91] : memref<4x490xbf16, #tpu.memory_space<vmem>>, vector<4x16xbf16>
    tpu.vector_store %arg5[%c0_11, %c91], %12 {strides = array<i32>} : memref<4x490xbf16, #tpu.memory_space<vmem>>, vector<4x16xbf16>,
    %c0_12 = arith.constant 0 : index
    %c107 = arith.constant 107 : index
    %14 = vector.load %arg5[%c0_12, %c107] : memref<4x490xbf16, #tpu.memory_space<vmem>>, vector<4x6xbf16>
    tpu.vector_store %arg5[%c0_12, %c107], %4 {strides = array<i32>} : memref<4x490xbf16, #tpu.memory_space<vmem>>, vector<4x6xbf16>,
    %c0_13 = arith.constant 0 : index
    %c0_14 = arith.constant 0 : index
    %c32 = arith.constant 32 : index
    %15 = vector.load %arg1[%c0_13, %c0_14, %c32] : memref<1x4x256xf32, #tpu.memory_space<vmem>>, vector<1x4x16xf32>
    %16 = vector.shape_cast %15 : vector<1x4x16xf32> to vector<4x16xf32>
    %17 = arith.truncf %16 : vector<4x16xf32> to vector<4x16xbf16>
    %c0_15 = arith.constant 0 : index
    %c113 = arith.constant 113 : index
    %18 = vector.load %arg5[%c0_15, %c113] : memref<4x490xbf16, #tpu.memory_space<vmem>>, vector<4x16xbf16>
    tpu.vector_store %arg5[%c0_15, %c113], %17 {strides = array<i32>} : memref<4x490xbf16, #tpu.memory_space<vmem>>, vector<4x16xbf16>,
    %c0_16 = arith.constant 0 : index
    %c129 = arith.constant 129 : index
    %19 = vector.load %arg5[%c0_16, %c129] : memref<4x490xbf16, #tpu.memory_space<vmem>>, vector<4x6xbf16>
    tpu.vector_store %arg5[%c0_16, %c129], %4 {strides = array<i32>} : memref<4x490xbf16, #tpu.memory_space<vmem>>, vector<4x6xbf16>,
    %c0_17 = arith.constant 0 : index
    %c0_18 = arith.constant 0 : index
    %c48 = arith.constant 48 : index
    %20 = vector.load %arg1[%c0_17, %c0_18, %c48] : memref<1x4x256xf32, #tpu.memory_space<vmem>>, vector<1x4x16xf32>
    %21 = vector.shape_cast %20 : vector<1x4x16xf32> to vector<4x16xf32>
    %22 = arith.truncf %21 : vector<4x16xf32> to vector<4x16xbf16>
    %c0_19 = arith.constant 0 : index
    %c135 = arith.constant 135 : index
    %23 = vector.load %arg5[%c0_19, %c135] : memref<4x490xbf16, #tpu.memory_space<vmem>>, vector<4x16xbf16>
    tpu.vector_store %arg5[%c0_19, %c135], %22 {strides = array<i32>} : memref<4x490xbf16, #tpu.memory_space<vmem>>, vector<4x16xbf16>,
    %c0_20 = arith.constant 0 : index
    %c151 = arith.constant 151 : index
    %24 = vector.load %arg5[%c0_20, %c151] : memref<4x490xbf16, #tpu.memory_space<vmem>>, vector<4x6xbf16>
    tpu.vector_store %arg5[%c0_20, %c151], %4 {strides = array<i32>} : memref<4x490xbf16, #tpu.memory_space<vmem>>, vector<4x6xbf16>,
    %c0_21 = arith.constant 0 : index
    %c0_22 = arith.constant 0 : index
    %c64 = arith.constant 64 : index
    %25 = vector.load %arg1[%c0_21, %c0_22, %c64] : memref<1x4x256xf32, #tpu.memory_space<vmem>>, vector<1x4x16xf32>
    %26 = vector.shape_cast %25 : vector<1x4x16xf32> to vector<4x16xf32>
    %27 = arith.truncf %26 : vector<4x16xf32> to vector<4x16xbf16>
    %c0_23 = arith.constant 0 : index
    %c157 = arith.constant 157 : index
    %28 = vector.load %arg5[%c0_23, %c157] : memref<4x490xbf16, #tpu.memory_space<vmem>>, vector<4x16xbf16>
    tpu.vector_store %arg5[%c0_23, %c157], %27 {strides = array<i32>} : memref<4x490xbf16, #tpu.memory_space<vmem>>, vector<4x16xbf16>,
    %c0_24 = arith.constant 0 : index
    %c173 = arith.constant 173 : index
    %29 = vector.load %arg5[%c0_24, %c173] : memref<4x490xbf16, #tpu.memory_space<vmem>>, vector<4x6xbf16>
    tpu.vector_store %arg5[%c0_24, %c173], %4 {strides = array<i32>} : memref<4x490xbf16, #tpu.memory_space<vmem>>, vector<4x6xbf16>,
    %c0_25 = arith.constant 0 : index
    %c0_26 = arith.constant 0 : index
    %c80 = arith.constant 80 : index
    %30 = vector.load %arg1[%c0_25, %c0_26, %c80] : memref<1x4x256xf32, #tpu.memory_space<vmem>>, vector<1x4x16xf32>
    %31 = vector.shape_cast %30 : vector<1x4x16xf32> to vector<4x16xf32>
    %32 = arith.truncf %31 : vector<4x16xf32> to vector<4x16xbf16>
    %c0_27 = arith.constant 0 : index
    %c179 = arith.constant 179 : index
    %33 = vector.load %arg5[%c0_27, %c179] : memref<4x490xbf16, #tpu.memory_space<vmem>>, vector<4x16xbf16>
    tpu.vector_store %arg5[%c0_27, %c179], %32 {strides = array<i32>} : memref<4x490xbf16, #tpu.memory_space<vmem>>, vector<4x16xbf16>,
    %c0_28 = arith.constant 0 : index
    %c195 = arith.constant 195 : index
    %34 = vector.load %arg5[%c0_28, %c195] : memref<4x490xbf16, #tpu.memory_space<vmem>>, vector<4x6xbf16>
    tpu.vector_store %arg5[%c0_28, %c195], %4 {strides = array<i32>} : memref<4x490xbf16, #tpu.memory_space<vmem>>, vector<4x6xbf16>,
    %c0_29 = arith.constant 0 : index
    %c0_30 = arith.constant 0 : index
    %c96 = arith.constant 96 : index
    %35 = vector.load %arg1[%c0_29, %c0_30, %c96] : memref<1x4x256xf32, #tpu.memory_space<vmem>>, vector<1x4x16xf32>
    %36 = vector.shape_cast %35 : vector<1x4x16xf32> to vector<4x16xf32>
    %37 = arith.truncf %36 : vector<4x16xf32> to vector<4x16xbf16>
    %c0_31 = arith.constant 0 : index
    %c201 = arith.constant 201 : index
    %38 = vector.load %arg5[%c0_31, %c201] : memref<4x490xbf16, #tpu.memory_space<vmem>>, vector<4x16xbf16>
    tpu.vector_store %arg5[%c0_31, %c201], %37 {strides = array<i32>} : memref<4x490xbf16, #tpu.memory_space<vmem>>, vector<4x16xbf16>,
    %c0_32 = arith.constant 0 : index
    %c217 = arith.constant 217 : index
    %39 = vector.load %arg5[%c0_32, %c217] : memref<4x490xbf16, #tpu.memory_space<vmem>>, vector<4x6xbf16>
    tpu.vector_store %arg5[%c0_32, %c217], %4 {strides = array<i32>} : memref<4x490xbf16, #tpu.memory_space<vmem>>, vector<4x6xbf16>,
    %c0_33 = arith.constant 0 : index
    %c0_34 = arith.constant 0 : index
    %c112 = arith.constant 112 : index
    %40 = vector.load %arg1[%c0_33, %c0_34, %c112] : memref<1x4x256xf32, #tpu.memory_space<vmem>>, vector<1x4x16xf32>
    %41 = vector.shape_cast %40 : vector<1x4x16xf32> to vector<4x16xf32>
    %42 = arith.truncf %41 : vector<4x16xf32> to vector<4x16xbf16>
    %c0_35 = arith.constant 0 : index
    %c223 = arith.constant 223 : index
    %43 = vector.load %arg5[%c0_35, %c223] : memref<4x490xbf16, #tpu.memory_space<vmem>>, vector<4x16xbf16>
    tpu.vector_store %arg5[%c0_35, %c223], %42 {strides = array<i32>} : memref<4x490xbf16, #tpu.memory_space<vmem>>, vector<4x16xbf16>,
    %c0_36 = arith.constant 0 : index
    %c239 = arith.constant 239 : index
    %44 = vector.load %arg5[%c0_36, %c239] : memref<4x490xbf16, #tpu.memory_space<vmem>>, vector<4x6xbf16>
    tpu.vector_store %arg5[%c0_36, %c239], %4 {strides = array<i32>} : memref<4x490xbf16, #tpu.memory_space<vmem>>, vector<4x6xbf16>,
    %c0_37 = arith.constant 0 : index
    %c0_38 = arith.constant 0 : index
    %c128 = arith.constant 128 : index
    %45 = vector.load %arg1[%c0_37, %c0_38, %c128] : memref<1x4x256xf32, #tpu.memory_space<vmem>>, vector<1x4x16xf32>
    %46 = vector.shape_cast %45 : vector<1x4x16xf32> to vector<4x16xf32>
    %47 = arith.truncf %46 : vector<4x16xf32> to vector<4x16xbf16>
    %c0_39 = arith.constant 0 : index
    %c245 = arith.constant 245 : index
    %48 = vector.load %arg5[%c0_39, %c245] : memref<4x490xbf16, #tpu.memory_space<vmem>>, vector<4x16xbf16>
    tpu.vector_store %arg5[%c0_39, %c245], %47 {strides = array<i32>} : memref<4x490xbf16, #tpu.memory_space<vmem>>, vector<4x16xbf16>,
    %c0_40 = arith.constant 0 : index
    %c261 = arith.constant 261 : index
    %49 = vector.load %arg5[%c0_40, %c261] : memref<4x490xbf16, #tpu.memory_space<vmem>>, vector<4x6xbf16>
    tpu.vector_store %arg5[%c0_40, %c261], %4 {strides = array<i32>} : memref<4x490xbf16, #tpu.memory_space<vmem>>, vector<4x6xbf16>,
    %c0_41 = arith.constant 0 : index
    %c0_42 = arith.constant 0 : index
    %c144 = arith.constant 144 : index
    %50 = vector.load %arg1[%c0_41, %c0_42, %c144] : memref<1x4x256xf32, #tpu.memory_space<vmem>>, vector<1x4x16xf32>
    %51 = vector.shape_cast %50 : vector<1x4x16xf32> to vector<4x16xf32>
    %52 = arith.truncf %51 : vector<4x16xf32> to vector<4x16xbf16>
    %c0_43 = arith.constant 0 : index
    %c267 = arith.constant 267 : index
    %53 = vector.load %arg5[%c0_43, %c267] : memref<4x490xbf16, #tpu.memory_space<vmem>>, vector<4x16xbf16>
    tpu.vector_store %arg5[%c0_43, %c267], %52 {strides = array<i32>} : memref<4x490xbf16, #tpu.memory_space<vmem>>, vector<4x16xbf16>,
    %c0_44 = arith.constant 0 : index
    %c283 = arith.constant 283 : index
    %54 = vector.load %arg5[%c0_44, %c283] : memref<4x490xbf16, #tpu.memory_space<vmem>>, vector<4x6xbf16>
    tpu.vector_store %arg5[%c0_44, %c283], %4 {strides = array<i32>} : memref<4x490xbf16, #tpu.memory_space<vmem>>, vector<4x6xbf16>,
    %c0_45 = arith.constant 0 : index
    %c0_46 = arith.constant 0 : index
    %c160 = arith.constant 160 : index
    %55 = vector.load %arg1[%c0_45, %c0_46, %c160] : memref<1x4x256xf32, #tpu.memory_space<vmem>>, vector<1x4x16xf32>
    %56 = vector.shape_cast %55 : vector<1x4x16xf32> to vector<4x16xf32>
    %57 = arith.truncf %56 : vector<4x16xf32> to vector<4x16xbf16>
    %c0_47 = arith.constant 0 : index
    %c289 = arith.constant 289 : index
    %58 = vector.load %arg5[%c0_47, %c289] : memref<4x490xbf16, #tpu.memory_space<vmem>>, vector<4x16xbf16>
    tpu.vector_store %arg5[%c0_47, %c289], %57 {strides = array<i32>} : memref<4x490xbf16, #tpu.memory_space<vmem>>, vector<4x16xbf16>,
    %c0_48 = arith.constant 0 : index
    %c305 = arith.constant 305 : index
    %59 = vector.load %arg5[%c0_48, %c305] : memref<4x490xbf16, #tpu.memory_space<vmem>>, vector<4x6xbf16>
    tpu.vector_store %arg5[%c0_48, %c305], %4 {strides = array<i32>} : memref<4x490xbf16, #tpu.memory_space<vmem>>, vector<4x6xbf16>,
    %c0_49 = arith.constant 0 : index
    %c0_50 = arith.constant 0 : index
    %c176 = arith.constant 176 : index
    %60 = vector.load %arg1[%c0_49, %c0_50, %c176] : memref<1x4x256xf32, #tpu.memory_space<vmem>>, vector<1x4x16xf32>
    %61 = vector.shape_cast %60 : vector<1x4x16xf32> to vector<4x16xf32>
    %62 = arith.truncf %61 : vector<4x16xf32> to vector<4x16xbf16>
    %c0_51 = arith.constant 0 : index
    %c311 = arith.constant 311 : index
    %63 = vector.load %arg5[%c0_51, %c311] : memref<4x490xbf16, #tpu.memory_space<vmem>>, vector<4x16xbf16>
    tpu.vector_store %arg5[%c0_51, %c311], %62 {strides = array<i32>} : memref<4x490xbf16, #tpu.memory_space<vmem>>, vector<4x16xbf16>,
    %c0_52 = arith.constant 0 : index
    %c327 = arith.constant 327 : index
    %64 = vector.load %arg5[%c0_52, %c327] : memref<4x490xbf16, #tpu.memory_space<vmem>>, vector<4x6xbf16>
    tpu.vector_store %arg5[%c0_52, %c327], %4 {strides = array<i32>} : memref<4x490xbf16, #tpu.memory_space<vmem>>, vector<4x6xbf16>,
    %c0_53 = arith.constant 0 : index
    %c0_54 = arith.constant 0 : index
    %c192 = arith.constant 192 : index
    %65 = vector.load %arg1[%c0_53, %c0_54, %c192] : memref<1x4x256xf32, #tpu.memory_space<vmem>>, vector<1x4x16xf32>
    %66 = vector.shape_cast %65 : vector<1x4x16xf32> to vector<4x16xf32>
    %67 = arith.truncf %66 : vector<4x16xf32> to vector<4x16xbf16>
    %c0_55 = arith.constant 0 : index
    %c333 = arith.constant 333 : index
    %68 = vector.load %arg5[%c0_55, %c333] : memref<4x490xbf16, #tpu.memory_space<vmem>>, vector<4x16xbf16>
    tpu.vector_store %arg5[%c0_55, %c333], %67 {strides = array<i32>} : memref<4x490xbf16, #tpu.memory_space<vmem>>, vector<4x16xbf16>,
    %c0_56 = arith.constant 0 : index
    %c349 = arith.constant 349 : index
    %69 = vector.load %arg5[%c0_56, %c349] : memref<4x490xbf16, #tpu.memory_space<vmem>>, vector<4x6xbf16>
    tpu.vector_store %arg5[%c0_56, %c349], %4 {strides = array<i32>} : memref<4x490xbf16, #tpu.memory_space<vmem>>, vector<4x6xbf16>,
    %c0_57 = arith.constant 0 : index
    %c0_58 = arith.constant 0 : index
    %c208 = arith.constant 208 : index
    %70 = vector.load %arg1[%c0_57, %c0_58, %c208] : memref<1x4x256xf32, #tpu.memory_space<vmem>>, vector<1x4x16xf32>
    %71 = vector.shape_cast %70 : vector<1x4x16xf32> to vector<4x16xf32>
    %72 = arith.truncf %71 : vector<4x16xf32> to vector<4x16xbf16>
    %c0_59 = arith.constant 0 : index
    %c355 = arith.constant 355 : index
    %73 = vector.load %arg5[%c0_59, %c355] : memref<4x490xbf16, #tpu.memory_space<vmem>>, vector<4x16xbf16>
    tpu.vector_store %arg5[%c0_59, %c355], %72 {strides = array<i32>} : memref<4x490xbf16, #tpu.memory_space<vmem>>, vector<4x16xbf16>,
    %c0_60 = arith.constant 0 : index
    %c371 = arith.constant 371 : index
    %74 = vector.load %arg5[%c0_60, %c371] : memref<4x490xbf16, #tpu.memory_space<vmem>>, vector<4x6xbf16>
    tpu.vector_store %arg5[%c0_60, %c371], %4 {strides = array<i32>} : memref<4x490xbf16, #tpu.memory_space<vmem>>, vector<4x6xbf16>,
    %c0_61 = arith.constant 0 : index
    %c0_62 = arith.constant 0 : index
    %c224 = arith.constant 224 : index
    %75 = vector.load %arg1[%c0_61, %c0_62, %c224] : memref<1x4x256xf32, #tpu.memory_space<vmem>>, vector<1x4x16xf32>
    %76 = vector.shape_cast %75 : vector<1x4x16xf32> to vector<4x16xf32>
    %77 = arith.truncf %76 : vector<4x16xf32> to vector<4x16xbf16>
    %c0_63 = arith.constant 0 : index
    %c377 = arith.constant 377 : index
    %78 = vector.load %arg5[%c0_63, %c377] : memref<4x490xbf16, #tpu.memory_space<vmem>>, vector<4x16xbf16>
    tpu.vector_store %arg5[%c0_63, %c377], %77 {strides = array<i32>} : memref<4x490xbf16, #tpu.memory_space<vmem>>, vector<4x16xbf16>,
    %c0_64 = arith.constant 0 : index
    %c393 = arith.constant 393 : index
    %79 = vector.load %arg5[%c0_64, %c393] : memref<4x490xbf16, #tpu.memory_space<vmem>>, vector<4x6xbf16>
    tpu.vector_store %arg5[%c0_64, %c393], %4 {strides = array<i32>} : memref<4x490xbf16, #tpu.memory_space<vmem>>, vector<4x6xbf16>,
    %c0_65 = arith.constant 0 : index
    %c0_66 = arith.constant 0 : index
    %c240 = arith.constant 240 : index
    %80 = vector.load %arg1[%c0_65, %c0_66, %c240] : memref<1x4x256xf32, #tpu.memory_space<vmem>>, vector<1x4x16xf32>
    %81 = vector.shape_cast %80 : vector<1x4x16xf32> to vector<4x16xf32>
    %82 = arith.truncf %81 : vector<4x16xf32> to vector<4x16xbf16>
    %c0_67 = arith.constant 0 : index
    %c399 = arith.constant 399 : index
    %83 = vector.load %arg5[%c0_67, %c399] : memref<4x490xbf16, #tpu.memory_space<vmem>>, vector<4x16xbf16>
    tpu.vector_store %arg5[%c0_67, %c399], %82 {strides = array<i32>} : memref<4x490xbf16, #tpu.memory_space<vmem>>, vector<4x16xbf16>,
    %c0_68 = arith.constant 0 : index
    %c415 = arith.constant 415 : index
    %84 = vector.load %arg5[%c0_68, %c415] : memref<4x490xbf16, #tpu.memory_space<vmem>>, vector<4x6xbf16>
    tpu.vector_store %arg5[%c0_68, %c415], %4 {strides = array<i32>} : memref<4x490xbf16, #tpu.memory_space<vmem>>, vector<4x6xbf16>,
    %c0_69 = arith.constant 0 : index
    %c0_70 = arith.constant 0 : index
    %c0_71 = arith.constant 0 : index
    %85 = vector.load %arg2[%c0_69, %c0_70, %c0_71] : memref<7x7x4xbf16, #tpu.memory_space<vmem>>, vector<7x7x4xbf16>
    %cst_72 = arith.constant 0.000000e+00 : f32
    %86 = vector.broadcast %cst_72 : f32 to vector<7x358xf32>
    %c0_73 = arith.constant 0 : index
    %c0_74 = arith.constant 0 : index
    %87 = vector.load %arg5[%c0_73, %c0_74] : memref<4x490xbf16, #tpu.memory_space<vmem>>, vector<4x358xbf16>
    %88 = vector.extract_strided_slice %85 {offsets = [0, 0, 0], sizes = [1, 7, 4], strides = [1, 1, 1]} : vector<7x7x4xbf16> to vector<1x7x4xbf16>
    %89 = vector.shape_cast %88 : vector<1x7x4xbf16> to vector<7x4xbf16>
    %cst_75 = arith.constant dense<0.000000e+00> : vector<7x358xf32>
    %90 = tpu.matmul %89, %87, %cst_75 {dimension_numbers = #tpu.dot_dimension_numbers<[1], [0], [0], [1], [0, 0, 1, 1], [], []>} : vector<7x4xbf16>, vector<4x358xbf16>, vector<7x358xf32> -> vector<7x358xf32>
    %91 = arith.addf %86, %90 : vector<7x358xf32>
    %c0_76 = arith.constant 0 : index
    %c22 = arith.constant 22 : index
    %92 = vector.load %arg5[%c0_76, %c22] : memref<4x490xbf16, #tpu.memory_space<vmem>>, vector<4x358xbf16>
    %93 = vector.extract_strided_slice %85 {offsets = [1, 0, 0], sizes = [1, 7, 4], strides = [1, 1, 1]} : vector<7x7x4xbf16> to vector<1x7x4xbf16>
    %94 = vector.shape_cast %93 : vector<1x7x4xbf16> to vector<7x4xbf16>
    %cst_77 = arith.constant dense<0.000000e+00> : vector<7x358xf32>
    %95 = tpu.matmul %94, %92, %cst_77 {dimension_numbers = #tpu.dot_dimension_numbers<[1], [0], [0], [1], [0, 0, 1, 1], [], []>} : vector<7x4xbf16>, vector<4x358xbf16>, vector<7x358xf32> -> vector<7x358xf32>
    %96 = arith.addf %91, %95 : vector<7x358xf32>
    %c0_78 = arith.constant 0 : index
    %c44 = arith.constant 44 : index
    %97 = vector.load %arg5[%c0_78, %c44] : memref<4x490xbf16, #tpu.memory_space<vmem>>, vector<4x358xbf16>
    %98 = vector.extract_strided_slice %85 {offsets = [2, 0, 0], sizes = [1, 7, 4], strides = [1, 1, 1]} : vector<7x7x4xbf16> to vector<1x7x4xbf16>
    %99 = vector.shape_cast %98 : vector<1x7x4xbf16> to vector<7x4xbf16>
    %cst_79 = arith.constant dense<0.000000e+00> : vector<7x358xf32>
    %100 = tpu.matmul %99, %97, %cst_79 {dimension_numbers = #tpu.dot_dimension_numbers<[1], [0], [0], [1], [0, 0, 1, 1], [], []>} : vector<7x4xbf16>, vector<4x358xbf16>, vector<7x358xf32> -> vector<7x358xf32>
    %101 = arith.addf %96, %100 : vector<7x358xf32>
    %c0_80 = arith.constant 0 : index
    %c66 = arith.constant 66 : index
    %102 = vector.load %arg5[%c0_80, %c66] : memref<4x490xbf16, #tpu.memory_space<vmem>>, vector<4x358xbf16>
    %103 = vector.extract_strided_slice %85 {offsets = [3, 0, 0], sizes = [1, 7, 4], strides = [1, 1, 1]} : vector<7x7x4xbf16> to vector<1x7x4xbf16>
    %104 = vector.shape_cast %103 : vector<1x7x4xbf16> to vector<7x4xbf16>
    %cst_81 = arith.constant dense<0.000000e+00> : vector<7x358xf32>
    %105 = tpu.matmul %104, %102, %cst_81 {dimension_numbers = #tpu.dot_dimension_numbers<[1], [0], [0], [1], [0, 0, 1, 1], [], []>} : vector<7x4xbf16>, vector<4x358xbf16>, vector<7x358xf32> -> vector<7x358xf32>
    %106 = arith.addf %101, %105 : vector<7x358xf32>
    %c0_82 = arith.constant 0 : index
    %c88 = arith.constant 88 : index
    %107 = vector.load %arg5[%c0_82, %c88] : memref<4x490xbf16, #tpu.memory_space<vmem>>, vector<4x358xbf16>
    %108 = vector.extract_strided_slice %85 {offsets = [4, 0, 0], sizes = [1, 7, 4], strides = [1, 1, 1]} : vector<7x7x4xbf16> to vector<1x7x4xbf16>
    %109 = vector.shape_cast %108 : vector<1x7x4xbf16> to vector<7x4xbf16>
    %cst_83 = arith.constant dense<0.000000e+00> : vector<7x358xf32>
    %110 = tpu.matmul %109, %107, %cst_83 {dimension_numbers = #tpu.dot_dimension_numbers<[1], [0], [0], [1], [0, 0, 1, 1], [], []>} : vector<7x4xbf16>, vector<4x358xbf16>, vector<7x358xf32> -> vector<7x358xf32>
    %111 = arith.addf %106, %110 : vector<7x358xf32>
    %c0_84 = arith.constant 0 : index
    %c110 = arith.constant 110 : index
    %112 = vector.load %arg5[%c0_84, %c110] : memref<4x490xbf16, #tpu.memory_space<vmem>>, vector<4x358xbf16>
    %113 = vector.extract_strided_slice %85 {offsets = [5, 0, 0], sizes = [1, 7, 4], strides = [1, 1, 1]} : vector<7x7x4xbf16> to vector<1x7x4xbf16>
    %114 = vector.shape_cast %113 : vector<1x7x4xbf16> to vector<7x4xbf16>
    %cst_85 = arith.constant dense<0.000000e+00> : vector<7x358xf32>
    %115 = tpu.matmul %114, %112, %cst_85 {dimension_numbers = #tpu.dot_dimension_numbers<[1], [0], [0], [1], [0, 0, 1, 1], [], []>} : vector<7x4xbf16>, vector<4x358xbf16>, vector<7x358xf32> -> vector<7x358xf32>
    %116 = arith.addf %111, %115 : vector<7x358xf32>
    %c0_86 = arith.constant 0 : index
    %c132 = arith.constant 132 : index
    %117 = vector.load %arg5[%c0_86, %c132] : memref<4x490xbf16, #tpu.memory_space<vmem>>, vector<4x358xbf16>
    %118 = vector.extract_strided_slice %85 {offsets = [6, 0, 0], sizes = [1, 7, 4], strides = [1, 1, 1]} : vector<7x7x4xbf16> to vector<1x7x4xbf16>
    %119 = vector.shape_cast %118 : vector<1x7x4xbf16> to vector<7x4xbf16>
    %cst_87 = arith.constant dense<0.000000e+00> : vector<7x358xf32>
    %120 = tpu.matmul %119, %117, %cst_87 {dimension_numbers = #tpu.dot_dimension_numbers<[1], [0], [0], [1], [0, 0, 1, 1], [], []>} : vector<7x4xbf16>, vector<4x358xbf16>, vector<7x358xf32> -> vector<7x358xf32>
    %121 = arith.addf %116, %120 : vector<7x358xf32>
    %c0_88 = arith.constant 0 : index
    %122 = memref.load %arg3[%c0_88] : memref<1xf32, #tpu.memory_space<smem>>
    %123 = vector.broadcast %122 : f32 to vector<1x352xf32>
    %124 = vector.extract_strided_slice %121 {offsets = [0, 0], sizes = [1, 352], strides = [1, 1]} : vector<7x358xf32> to vector<1x352xf32>
    %125 = arith.addf %123, %124 : vector<1x352xf32>
    %126 = vector.extract_strided_slice %121 {offsets = [1, 1], sizes = [1, 352], strides = [1, 1]} : vector<7x358xf32> to vector<1x352xf32>
    %127 = arith.addf %125, %126 : vector<1x352xf32>
    %128 = vector.extract_strided_slice %121 {offsets = [2, 2], sizes = [1, 352], strides = [1, 1]} : vector<7x358xf32> to vector<1x352xf32>
    %129 = arith.addf %127, %128 : vector<1x352xf32>
    %130 = vector.extract_strided_slice %121 {offsets = [3, 3], sizes = [1, 352], strides = [1, 1]} : vector<7x358xf32> to vector<1x352xf32>
    %131 = arith.addf %129, %130 : vector<1x352xf32>
    %132 = vector.extract_strided_slice %121 {offsets = [4, 4], sizes = [1, 352], strides = [1, 1]} : vector<7x358xf32> to vector<1x352xf32>
    %133 = arith.addf %131, %132 : vector<1x352xf32>
    %134 = vector.extract_strided_slice %121 {offsets = [5, 5], sizes = [1, 352], strides = [1, 1]} : vector<7x358xf32> to vector<1x352xf32>
    %135 = arith.addf %133, %134 : vector<1x352xf32>
    %136 = vector.extract_strided_slice %121 {offsets = [6, 6], sizes = [1, 352], strides = [1, 1]} : vector<7x358xf32> to vector<1x352xf32>
    %137 = arith.addf %135, %136 : vector<1x352xf32>
    %138 = arith.negf %137 : vector<1x352xf32>
    %139 = math.exp %138 : vector<1x352xf32>
    %cst_89 = arith.constant 1.000000e+00 : f32
    %140 = vector.broadcast %cst_89 : f32 to vector<1x352xf32>
    %141 = arith.addf %140, %139 : vector<1x352xf32>
    %142 = arith.divf %140, %141 : vector<1x352xf32>
    %c0_90 = arith.constant 0 : index
    %c0_91 = arith.constant 0 : index
    %143 = vector.load %arg6[%c0_90, %c0_91] : memref<1x352xf32, #tpu.memory_space<vmem>>, vector<1x352xf32>
    tpu.vector_store %arg6[%c0_90, %c0_91], %142 {strides = array<i32>} : memref<1x352xf32, #tpu.memory_space<vmem>>, vector<1x352xf32>,
    %c0_92 = arith.constant 0 : index
    %c0_93 = arith.constant 0 : index
    %144 = vector.load %arg6[%c0_92, %c0_93] : memref<1x352xf32, #tpu.memory_space<vmem>>, vector<1x16xf32>
    %c0_94 = arith.constant 0 : index
    %c0_95 = arith.constant 0 : index
    %145 = vector.load %arg7[%c0_94, %c0_95] : memref<1x256xf32, #tpu.memory_space<vmem>>, vector<1x16xf32>
    tpu.vector_store %arg7[%c0_94, %c0_95], %144 {strides = array<i32>} : memref<1x256xf32, #tpu.memory_space<vmem>>, vector<1x16xf32>,
    %c0_96 = arith.constant 0 : index
    %c22_97 = arith.constant 22 : index
    %146 = vector.load %arg6[%c0_96, %c22_97] : memref<1x352xf32, #tpu.memory_space<vmem>>, vector<1x16xf32>
    %c0_98 = arith.constant 0 : index
    %c16_99 = arith.constant 16 : index
    %147 = vector.load %arg7[%c0_98, %c16_99] : memref<1x256xf32, #tpu.memory_space<vmem>>, vector<1x16xf32>
    tpu.vector_store %arg7[%c0_98, %c16_99], %146 {strides = array<i32>} : memref<1x256xf32, #tpu.memory_space<vmem>>, vector<1x16xf32>,
    %c0_100 = arith.constant 0 : index
    %c44_101 = arith.constant 44 : index
    %148 = vector.load %arg6[%c0_100, %c44_101] : memref<1x352xf32, #tpu.memory_space<vmem>>, vector<1x16xf32>
    %c0_102 = arith.constant 0 : index
    %c32_103 = arith.constant 32 : index
    %149 = vector.load %arg7[%c0_102, %c32_103] : memref<1x256xf32, #tpu.memory_space<vmem>>, vector<1x16xf32>
    tpu.vector_store %arg7[%c0_102, %c32_103], %148 {strides = array<i32>} : memref<1x256xf32, #tpu.memory_space<vmem>>, vector<1x16xf32>,
    %c0_104 = arith.constant 0 : index
    %c66_105 = arith.constant 66 : index
    %150 = vector.load %arg6[%c0_104, %c66_105] : memref<1x352xf32, #tpu.memory_space<vmem>>, vector<1x16xf32>
    %c0_106 = arith.constant 0 : index
    %c48_107 = arith.constant 48 : index
    %151 = vector.load %arg7[%c0_106, %c48_107] : memref<1x256xf32, #tpu.memory_space<vmem>>, vector<1x16xf32>
    tpu.vector_store %arg7[%c0_106, %c48_107], %150 {strides = array<i32>} : memref<1x256xf32, #tpu.memory_space<vmem>>, vector<1x16xf32>,
    %c0_108 = arith.constant 0 : index
    %c88_109 = arith.constant 88 : index
    %152 = vector.load %arg6[%c0_108, %c88_109] : memref<1x352xf32, #tpu.memory_space<vmem>>, vector<1x16xf32>
    %c0_110 = arith.constant 0 : index
    %c64_111 = arith.constant 64 : index
    %153 = vector.load %arg7[%c0_110, %c64_111] : memref<1x256xf32, #tpu.memory_space<vmem>>, vector<1x16xf32>
    tpu.vector_store %arg7[%c0_110, %c64_111], %152 {strides = array<i32>} : memref<1x256xf32, #tpu.memory_space<vmem>>, vector<1x16xf32>,
    %c0_112 = arith.constant 0 : index
    %c110_113 = arith.constant 110 : index
    %154 = vector.load %arg6[%c0_112, %c110_113] : memref<1x352xf32, #tpu.memory_space<vmem>>, vector<1x16xf32>
    %c0_114 = arith.constant 0 : index
    %c80_115 = arith.constant 80 : index
    %155 = vector.load %arg7[%c0_114, %c80_115] : memref<1x256xf32, #tpu.memory_space<vmem>>, vector<1x16xf32>
    tpu.vector_store %arg7[%c0_114, %c80_115], %154 {strides = array<i32>} : memref<1x256xf32, #tpu.memory_space<vmem>>, vector<1x16xf32>,
    %c0_116 = arith.constant 0 : index
    %c132_117 = arith.constant 132 : index
    %156 = vector.load %arg6[%c0_116, %c132_117] : memref<1x352xf32, #tpu.memory_space<vmem>>, vector<1x16xf32>
    %c0_118 = arith.constant 0 : index
    %c96_119 = arith.constant 96 : index
    %157 = vector.load %arg7[%c0_118, %c96_119] : memref<1x256xf32, #tpu.memory_space<vmem>>, vector<1x16xf32>
    tpu.vector_store %arg7[%c0_118, %c96_119], %156 {strides = array<i32>} : memref<1x256xf32, #tpu.memory_space<vmem>>, vector<1x16xf32>,
    %c0_120 = arith.constant 0 : index
    %c154 = arith.constant 154 : index
    %158 = vector.load %arg6[%c0_120, %c154] : memref<1x352xf32, #tpu.memory_space<vmem>>, vector<1x16xf32>
    %c0_121 = arith.constant 0 : index
    %c112_122 = arith.constant 112 : index
    %159 = vector.load %arg7[%c0_121, %c112_122] : memref<1x256xf32, #tpu.memory_space<vmem>>, vector<1x16xf32>
    tpu.vector_store %arg7[%c0_121, %c112_122], %158 {strides = array<i32>} : memref<1x256xf32, #tpu.memory_space<vmem>>, vector<1x16xf32>,
    %c0_123 = arith.constant 0 : index
    %c176_124 = arith.constant 176 : index
    %160 = vector.load %arg6[%c0_123, %c176_124] : memref<1x352xf32, #tpu.memory_space<vmem>>, vector<1x16xf32>
    %c0_125 = arith.constant 0 : index
    %c128_126 = arith.constant 128 : index
    %161 = vector.load %arg7[%c0_125, %c128_126] : memref<1x256xf32, #tpu.memory_space<vmem>>, vector<1x16xf32>
    tpu.vector_store %arg7[%c0_125, %c128_126], %160 {strides = array<i32>} : memref<1x256xf32, #tpu.memory_space<vmem>>, vector<1x16xf32>,
    %c0_127 = arith.constant 0 : index
    %c198 = arith.constant 198 : index
    %162 = vector.load %arg6[%c0_127, %c198] : memref<1x352xf32, #tpu.memory_space<vmem>>, vector<1x16xf32>
    %c0_128 = arith.constant 0 : index
    %c144_129 = arith.constant 144 : index
    %163 = vector.load %arg7[%c0_128, %c144_129] : memref<1x256xf32, #tpu.memory_space<vmem>>, vector<1x16xf32>
    tpu.vector_store %arg7[%c0_128, %c144_129], %162 {strides = array<i32>} : memref<1x256xf32, #tpu.memory_space<vmem>>, vector<1x16xf32>,
    %c0_130 = arith.constant 0 : index
    %c220 = arith.constant 220 : index
    %164 = vector.load %arg6[%c0_130, %c220] : memref<1x352xf32, #tpu.memory_space<vmem>>, vector<1x16xf32>
    %c0_131 = arith.constant 0 : index
    %c160_132 = arith.constant 160 : index
    %165 = vector.load %arg7[%c0_131, %c160_132] : memref<1x256xf32, #tpu.memory_space<vmem>>, vector<1x16xf32>
    tpu.vector_store %arg7[%c0_131, %c160_132], %164 {strides = array<i32>} : memref<1x256xf32, #tpu.memory_space<vmem>>, vector<1x16xf32>,
    %c0_133 = arith.constant 0 : index
    %c242 = arith.constant 242 : index
    %166 = vector.load %arg6[%c0_133, %c242] : memref<1x352xf32, #tpu.memory_space<vmem>>, vector<1x16xf32>
    %c0_134 = arith.constant 0 : index
    %c176_135 = arith.constant 176 : index
    %167 = vector.load %arg7[%c0_134, %c176_135] : memref<1x256xf32, #tpu.memory_space<vmem>>, vector<1x16xf32>
    tpu.vector_store %arg7[%c0_134, %c176_135], %166 {strides = array<i32>} : memref<1x256xf32, #tpu.memory_space<vmem>>, vector<1x16xf32>,
    %c0_136 = arith.constant 0 : index
    %c264 = arith.constant 264 : index
    %168 = vector.load %arg6[%c0_136, %c264] : memref<1x352xf32, #tpu.memory_space<vmem>>, vector<1x16xf32>
    %c0_137 = arith.constant 0 : index
    %c192_138 = arith.constant 192 : index
    %169 = vector.load %arg7[%c0_137, %c192_138] : memref<1x256xf32, #tpu.memory_space<vmem>>, vector<1x16xf32>
    tpu.vector_store %arg7[%c0_137, %c192_138], %168 {strides = array<i32>} : memref<1x256xf32, #tpu.memory_space<vmem>>, vector<1x16xf32>,
    %c0_139 = arith.constant 0 : index
    %c286 = arith.constant 286 : index
    %170 = vector.load %arg6[%c0_139, %c286] : memref<1x352xf32, #tpu.memory_space<vmem>>, vector<1x16xf32>
    %c0_140 = arith.constant 0 : index
    %c208_141 = arith.constant 208 : index
    %171 = vector.load %arg7[%c0_140, %c208_141] : memref<1x256xf32, #tpu.memory_space<vmem>>, vector<1x16xf32>
    tpu.vector_store %arg7[%c0_140, %c208_141], %170 {strides = array<i32>} : memref<1x256xf32, #tpu.memory_space<vmem>>, vector<1x16xf32>,
    %c0_142 = arith.constant 0 : index
    %c308 = arith.constant 308 : index
    %172 = vector.load %arg6[%c0_142, %c308] : memref<1x352xf32, #tpu.memory_space<vmem>>, vector<1x16xf32>
    %c0_143 = arith.constant 0 : index
    %c224_144 = arith.constant 224 : index
    %173 = vector.load %arg7[%c0_143, %c224_144] : memref<1x256xf32, #tpu.memory_space<vmem>>, vector<1x16xf32>
    tpu.vector_store %arg7[%c0_143, %c224_144], %172 {strides = array<i32>} : memref<1x256xf32, #tpu.memory_space<vmem>>, vector<1x16xf32>,
    %c0_145 = arith.constant 0 : index
    %c330 = arith.constant 330 : index
    %174 = vector.load %arg6[%c0_145, %c330] : memref<1x352xf32, #tpu.memory_space<vmem>>, vector<1x16xf32>
    %c0_146 = arith.constant 0 : index
    %c240_147 = arith.constant 240 : index
    %175 = vector.load %arg7[%c0_146, %c240_147] : memref<1x256xf32, #tpu.memory_space<vmem>>, vector<1x16xf32>
    tpu.vector_store %arg7[%c0_146, %c240_147], %174 {strides = array<i32>} : memref<1x256xf32, #tpu.memory_space<vmem>>, vector<1x16xf32>,
    %c0_148 = arith.constant 0 : index
    %c0_149 = arith.constant 0 : index
    %c0_150 = arith.constant 0 : index
    %176 = vector.load %arg1[%c0_148, %c0_149, %c0_150] : memref<1x4x256xf32, #tpu.memory_space<vmem>>, vector<1x4x256xf32>
    %177 = vector.shape_cast %176 : vector<1x4x256xf32> to vector<4x256xf32>
    %c0_151 = arith.constant 0 : index
    %c0_152 = arith.constant 0 : index
    %178 = vector.load %arg7[%c0_151, %c0_152] : memref<1x256xf32, #tpu.memory_space<vmem>>, vector<1x256xf32>
    %179 = vector.broadcast %178 : vector<1x256xf32> to vector<4x256xf32>
    %180 = arith.mulf %177, %179 : vector<4x256xf32>
    %c0_153 = arith.constant 0 : index
    %c0_154 = arith.constant 0 : index
    %c0_155 = arith.constant 0 : index
    %181 = vector.load %arg4[%c0_153, %c0_154, %c0_155] : memref<1x4x256xf32, #tpu.memory_space<vmem>>, vector<1x4x256xf32>
    %182 = vector.shape_cast %181 : vector<1x4x256xf32> to vector<4x256xf32>
    %183 = vector.shape_cast %180 : vector<4x256xf32> to vector<1x4x256xf32>
    tpu.vector_store %arg4[%c0_153, %c0_154, %c0_155], %183 {strides = array<i32>} : memref<1x4x256xf32, #tpu.memory_space<vmem>>, vector<1x4x256xf32>,
    return
  }
  func.func @transform_0(%arg0: i32) -> (i32, i32, i32) {
    %c0_i32 = arith.constant 0 : i32
    %c0_i32_0 = arith.constant 0 : i32
    %c0_i32_1 = arith.constant 0 : i32
    return %arg0, %c0_i32, %c0_i32_0 : i32, i32, i32
  }
  func.func @transform_1(%arg0: i32) -> (i32, i32, i32) {
    %c0_i32 = arith.constant 0 : i32
    %c0_i32_0 = arith.constant 0 : i32
    %c0_i32_1 = arith.constant 0 : i32
    %c0_i32_2 = arith.constant 0 : i32
    return %c0_i32, %c0_i32_0, %c0_i32_1 : i32, i32, i32
  }
  func.func @transform_2(%arg0: i32) -> i32 {
    %c0_i32 = arith.constant 0 : i32
    %c0_i32_0 = arith.constant 0 : i32
    return %c0_i32 : i32
  }
  func.func @transform_3(%arg0: i32) -> (i32, i32, i32) {
    %c0_i32 = arith.constant 0 : i32
    %c0_i32_0 = arith.constant 0 : i32
    %c0_i32_1 = arith.constant 0 : i32
    return %arg0, %c0_i32, %c0_i32_0 : i32, i32, i32
  }
}

</mosaic_0001>

<llo_original>
// kernel: spatial_attention.1
$region0: #{spatial_attention.1}
  #allocation0 [shape = 'u32[]', space=smem, size = 0x4, offset = 0x4, fixed_abs, tag = 'smem constant byte address 0x4 - core index']
  #allocation1 [shape = 'u32[144,128]{1,0:T(1,128)}', space=vmem, size = 0x12000, scoped, tag = 'internal scratch']
  #allocation2 [shape = 'bf16[4,490]{1,0:T(4,128)(2,1)}', space=vmem, size = 0x1000, scoped, tag = 'scratch operand']
  #allocation3 [shape = 'f32[1,352]{1,0:T(1,128)}', space=vmem, size = 0x600, scoped, tag = 'scratch operand']
  #allocation4 [shape = 'f32[1,256]{1,0:T(1,128)}', space=vmem, size = 0x400, scoped, tag = 'scratch operand']
  #allocation5 [shape = 'f32[1]{0:T(128)S(6)}', space=smem, size = 0x200, scoped, tag = 'scoped memory for spatial_attention.1']
  %s0 = inlined_call_operand.vmem [shape: f32[2,4,256], index: 0, kind: input, shape index: {}]
  %s1 = inlined_call_operand.vmem [shape: bf16[7,7,4], index: 1, kind: input, shape index: {}]
  %s2 = inlined_call_operand.<no memory space> [shape: f32[1], index: 2, kind: input, shape index: {}]
  %s3 = inlined_call_operand.vmem [shape: f32[2,4,256], index: 3, kind: output, shape index: {}]
  %s4 = sld [smem:[#allocation0]]
  $region45: #{spatial_attention.1} parent=0
    _
  %s6 = ssub.s32 1, %s4
  %s7 = scalar_select 0, %s6, %s4
  %8 = sst [smem:[#allocation5]] %s2
  loop: start=0, step=1, limit=4
  $region2: #{spatial_attention.1} parent=0 // loop_pre_header
    _
  $region3: #{spatial_attention.1} parent=0 // loop_header
    %s10 = sphi 0, %s14
    %p11 = scmp.ge.s32.totalorder %s10, 4
    %s20 = sphi 0, %s22
    %s23 = sphi 0, %s20
    %s24 = sphi 0, %s23
    %s40 = sphi 0, %s24
    %s44 = sphi 0, %s44
    %s46 = sphi 0, %s44
    %s47 = sphi 0, %s46
    %s61 = sphi 0, %s47
    %s65 = sphi 0, %s65
    %s67 = sphi 0, %s65
    %s68 = sphi 0, %s67
    %s82 = sphi 0, %s68
    %s88 = sphi 0, %s90
    %s91 = sphi 0, %s88
    %s92 = sphi 0, %s91
    %s108 = sphi 0, %s92
  $region4: #{spatial_attention.1} parent=0 // loop_header_branch
    %13 = sbr.rel (%p11) target = $region8
  $region5: #{spatial_attention.1} parent=0 // loop_body
    %s15 = ssub.s32 %s10, 1
    %s16 = ssub.s32 %s10, 2
    %s17 = sadd.s32 %s10, 1
    %s18 = ssub.s32 %s10, %s17
    %p19 = scmp.eq.s32.totalorder %s18, 0
    %s21 = sadd.s32 %s20, 1
    %s22 = scalar_select %p19, %s20, %s21
    %p25 = pneg %p19
    %p26 = scmp.eq.s32.totalorder %s10, 1
    %p27 = por %p25, %p26
    %p28 = scmp.ne.s32.totalorder %s20, %s23
    %p29 = scmp.eq.s32.totalorder %s10, 0
    %p30 = por %p28, %p29
    %p31 = scmp.ne.s32.totalorder %s20, %s23
    %p32 = scmp.eq.s32.totalorder %s15, 1
    %p33 = por %p31, %p32
    %p34 = scmp.ne.s32.totalorder %s23, %s24
    %p35 = scmp.eq.s32.totalorder %s15, 0
    %p36 = por %p34, %p35
    %p37 = scmp.ne.s32.totalorder %s23, %s24
    %p38 = scmp.eq.s32.totalorder %s16, 1
    %p39 = por %p37, %p38
    %p41 = scmp.ne.s32.totalorder %s24, %s40
    %p42 = scmp.eq.s32.totalorder %s16, 0
    %p43 = por %p41, %p42
    %s45 = sadd.s32 %s44, 1
    %p48 = scmp.eq.s32.totalorder %s10, 1
    %p49 = scmp.ne.s32.totalorder %s44, %s46
    %p50 = scmp.eq.s32.totalorder %s10, 0
    %p51 = por %p49, %p50
    %p52 = scmp.ne.s32.totalorder %s44, %s46
    %p53 = scmp.eq.s32.totalorder %s15, 1
    %p54 = por %p52, %p53
    %p55 = scmp.ne.s32.totalorder %s46, %s47
    %p56 = scmp.eq.s32.totalorder %s15, 0
    %p57 = por %p55, %p56
    %p58 = scmp.ne.s32.totalorder %s46, %s47
    %p59 = scmp.eq.s32.totalorder %s16, 1
    %p60 = por %p58, %p59
    %p62 = scmp.ne.s32.totalorder %s47, %s61
    %p63 = scmp.eq.s32.totalorder %s16, 0
    %p64 = por %p62, %p63
    %s66 = sadd.s32 %s65, 1
    %p69 = scmp.eq.s32.totalorder %s10, 1
    %p70 = scmp.ne.s32.totalorder %s65, %s67
    %p71 = scmp.eq.s32.totalorder %s10, 0
    %p72 = por %p70, %p71
    %p73 = scmp.ne.s32.totalorder %s65, %s67
    %p74 = scmp.eq.s32.totalorder %s15, 1
    %p75 = por %p73, %p74
    %p76 = scmp.ne.s32.totalorder %s67, %s68
    %p77 = scmp.eq.s32.totalorder %s15, 0
    %p78 = por %p76, %p77
    %p79 = scmp.ne.s32.totalorder %s67, %s68
    %p80 = scmp.eq.s32.totalorder %s16, 1
    %p81 = por %p79, %p80
    %p83 = scmp.ne.s32.totalorder %s68, %s82
    %p84 = scmp.eq.s32.totalorder %s16, 0
    %p85 = por %p83, %p84
    %s86 = ssub.s32 %s10, %s17
    %p87 = scmp.eq.s32.totalorder %s86, 0
    %s89 = sadd.s32 %s88, 1
    %s90 = scalar_select %p87, %s88, %s89
    %p93 = pneg %p87
    %p94 = scmp.eq.s32.totalorder %s10, 1
    %p95 = por %p93, %p94
    %p96 = scmp.ne.s32.totalorder %s88, %s91
    %p97 = scmp.eq.s32.totalorder %s10, 0
    %p98 = por %p96, %p97
    %p99 = scmp.ne.s32.totalorder %s88, %s91
    %p100 = scmp.eq.s32.totalorder %s15, 1
    %p101 = por %p99, %p100
    %p102 = scmp.ne.s32.totalorder %s91, %s92
    %p103 = scmp.eq.s32.totalorder %s15, 0
    %p104 = por %p102, %p103
    %p105 = scmp.ne.s32.totalorder %s91, %s92
    %p106 = scmp.eq.s32.totalorder %s16, 1
    %p107 = por %p105, %p106
    %p109 = scmp.ne.s32.totalorder %s92, %s108
    %p110 = scmp.eq.s32.totalorder %s16, 0
    %p111 = por %p109, %p110
    %p112 = scmp.le.s32.totalorder 1, %s10
    %p113 = scmp.lt.s32.totalorder %s10, 3
    %p114 = pnand %p112, %p113
    %p115 = pneg %p114
    // Predicated region
    $region9: #{spatial_attention.1} parent=5 // pred_check
      _
    $region10: #{spatial_attention.1} parent=5 // pred_check_branch
      %117 = sbr.rel (%p114) target = $region12
    $region11: #{spatial_attention.1} parent=5 // pred_region
      %s118 = ssub.s32 %s10, 1
      // Predicated region
      $region13: #{spatial_attention.1} parent=11 // pred_check
        %p119 = pneg %p57
      $region14: #{spatial_attention.1} parent=11 // pred_check_branch
        %121 = sbr.rel (%p119) target = $region16
      $region15: #{spatial_attention.1} parent=11 // pred_region
        _
      $region16: #{spatial_attention.1} parent=11 // pred_fallthru
        _
      // Predicated region
      $region17: #{spatial_attention.1} parent=11 // pred_check
        %p122 = pneg %p78
      $region18: #{spatial_attention.1} parent=11 // pred_check_branch
        %124 = sbr.rel (%p122) target = $region20
      $region19: #{spatial_attention.1} parent=11 // pred_region
        _
      $region20: #{spatial_attention.1} parent=11 // pred_fallthru
        _
    $region12: #{spatial_attention.1} parent=5 // pred_fallthru
      _
    %p125 = scmp.lt.s32.totalorder %s10, 2
    // Predicated region
    $region21: #{spatial_attention.1} parent=5 // pred_check
      %p126 = pneg %p125
    $region22: #{spatial_attention.1} parent=5 // pred_check_branch
      %128 = sbr.rel (%p126) target = $region24
    $region23: #{spatial_attention.1} parent=5 // pred_region
      // Predicated region
      $region25: #{spatial_attention.1} parent=23 // pred_check
        %p129 = pneg %p30
      $region26: #{spatial_attention.1} parent=23 // pred_check_branch
        %131 = sbr.rel (%p129) target = $region28
      $region27: #{spatial_attention.1} parent=23 // pred_region
        %p132 = scmp.lt.s32.totalorder %s10, 1
        %s133 = scalar_select %p132, %s10, 1
        %s134 = smul.addr %s133, 2
        %s135 = smul.addr %s134, 4
        %s136 = scalar_lea.vmem %s0, %s135
      $region28: #{spatial_attention.1} parent=23 // pred_fallthru
        _
    $region24: #{spatial_attention.1} parent=5 // pred_fallthru
      _
    %p137 = scmp.le.s32.totalorder 1, %s10
    %p138 = scmp.lt.s32.totalorder %s10, 3
    %p139 = pnand %p137, %p138
    %p140 = pneg %p139
    // Predicated region
    $region29: #{spatial_attention.1} parent=5 // pred_check
      _
    $region30: #{spatial_attention.1} parent=5 // pred_check_branch
      %142 = sbr.rel (%p139) target = $region32
    $region31: #{spatial_attention.1} parent=5 // pred_region
      %s143 = ssub.s32 %s10, 1
      %p144 = scmp.lt.s32.totalorder %s15, 1
      %s145 = scalar_select %p144, %s15, 1
      %s146 = smul.addr %s145, 2
      %s147 = smul.addr %s146, 4
      %s148 = scalar_lea.vmem %s0, %s147
      %p149 = pneg %p36
      %p150 = pneg %p33
      %p151 = pneg %p57
      %p152 = pneg %p54
      %p153 = pneg %p78
      %p154 = pneg %p75
      %p155 = pneg %p104
      %p156 = pneg %p101
      %p157 = scmp.lt.s32.totalorder %s15, 1
      %s158 = scalar_select %p157, %s15, 1
      %s159 = smul.addr %s158, 2
      %s160 = smul.addr %s159, 4
      %s161 = scalar_lea.vmem %s3, %s160
      %p162 = scmp.lt.s32.totalorder %s15, 1
      %s163 = scalar_select %p162, %s15, 1
      %s164 = smul.addr %s163, 2
      %s165 = smul.addr %s164, 4
      %s166 = scalar_lea.vmem %s0, %s165
      %p167 = scmp.lt.s32.totalorder %s15, 1
      %s168 = scalar_select %p167, %s15, 1
      %s169 = smul.addr %s168, 2
      %s170 = smul.addr %s169, 4
      %s171 = scalar_lea.vmem %s3, %s170
      %vm173 = vcmask 558080
      %174 = vst.msk [vmem:[#allocation2] sm:$0x3] %vm173, 0
      %vm175 = vcmask 861480
      %176 = vst.msk [vmem:[#allocation2 + $0x6] sm:$0x3] %vm175, 0
      %v177 = vld [vmem:[%s166] sm:$0xf]
      %v178 = vpack.c.bf16 %v177, %v177
      %v181 = vunpack.c.l.s4 1983009808
      %v182 = vunpack.c.0.s8 %v181
      %v183 = vlaneseq
      %v184 = vshrl.u32 %v183, 7
      %v185 = vsub.s32 %v182, %v184
      %v186 = vrot.slane %v178, %v185
      %187 = vrot.lane.b32.xlu0 %v186, 69
      %v188 = vpop.permute.xlu0 %187
      %vm190 = vcmask 689704
      %191 = vst.msk [vmem:[#allocation2] sm:$0x3] %vm190, %v188
      %vm192 = vcmask 738984
      %193 = vst.msk [vmem:[#allocation2] sm:$0x3] %vm192, 0
      %v194 = vld [vmem:[%s166] sm:$0xf]
      %v195 = vpack.c.bf16 %v194, %v194
      %v198 = vunpack.c.l.s4 1983009808
      %v199 = vunpack.c.0.s8 %v198
      %v200 = vlaneseq
      %v201 = vshrl.u32 %v200, 7
      %v202 = vsub.s32 %v199, %v201
      %v203 = vrot.slane %v195, %v202
      %204 = vrot.lane.b32.xlu0 %v203, 75
      %v205 = vpop.permute.xlu0 %204
      %vm207 = vcmask 870104
      %208 = vst.msk [vmem:[#allocation2] sm:$0x3] %vm207, %v205
      %vm209 = vcmask 919384
      %210 = vst.msk [vmem:[#allocation2] sm:$0x3] %vm209, 0
      %v211 = vld [vmem:[%s166] sm:$0xf]
      %v212 = vpack.c.bf16 %v211, %v211
      %v215 = vunpack.c.l.s4 1983009808
      %v216 = vunpack.c.0.s8 %v215
      %v217 = vlaneseq
      %v218 = vshrl.u32 %v217, 7
      %v219 = vsub.s32 %v216, %v218
      %v220 = vrot.slane %v212, %v219
      %221 = vrot.lane.b32.xlu0 %v220, 81
      %v222 = vpop.permute.xlu0 %221
      %v223 = vrot.slane %v222, 6
      %vm224 = vcmask 662528
      %v225 = vsel %vm224, %v223, %v222
      %vm227 = vcmask 1042312
      %vm228 = vcmask 3074
      %vm229 = vmor %vm228, %vm227
      %230 = vst.msk [vmem:[#allocation2] sm:$0xf] %vm229, %v225
      %vm231 = vcmask 50184
      %232 = vst.msk [vmem:[#allocation2 + $0x2] sm:$0x3] %vm231, 0
      %v233 = vld [vmem:[%s166] sm:$0xf]
      %v234 = vpack.c.bf16 %v233, %v233
      %v237 = vunpack.c.l.s4 1983009808
      %v238 = vunpack.c.0.s8 %v237
      %v239 = vlaneseq
      %v240 = vshrl.u32 %v239, 7
      %v241 = vsub.s32 %v238, %v240
      %v242 = vrot.slane %v234, %v241
      %243 = vrot.lane.b32.xlu0 %v242, 87
      %v244 = vpop.permute.xlu0 %243
      %vm246 = vcmask 181304
      %247 = vst.msk [vmem:[#allocation2 + $0x2] sm:$0x3] %vm246, %v244
      %vm248 = vcmask 230584
      %249 = vst.msk [vmem:[#allocation2 + $0x2] sm:$0x3] %vm248, 0
      %v250 = vld [vmem:[%s166] sm:$0xf]
      %v251 = vpack.c.bf16 %v250, %v250
      %v254 = vunpack.c.l.s4 1983009808
      %v255 = vunpack.c.0.s8 %v254
      %v256 = vlaneseq
      %v257 = vshrl.u32 %v256, 7
      %v258 = vsub.s32 %v255, %v257
      %v259 = vrot.slane %v251, %v258
      %260 = vrot.lane.b32.xlu0 %v259, 93
      %v261 = vpop.permute.xlu0 %260
      %vm263 = vcmask 361704
      %264 = vst.msk [vmem:[#allocation2 + $0x2] sm:$0x3] %vm263, %v261
      %vm265 = vcmask 410984
      %266 = vst.msk [vmem:[#allocation2 + $0x2] sm:$0x3] %vm265, 0
      %v267 = vld [vmem:[%s166] sm:$0xf]
      %v268 = vpack.c.bf16 %v267, %v267
      %v271 = vunpack.c.l.s4 1983009808
      %v272 = vunpack.c.0.s8 %v271
      %v273 = vlaneseq
      %v274 = vshrl.u32 %v273, 7
      %v275 = vsub.s32 %v272, %v274
      %v276 = vrot.slane %v268, %v275
      %277 = vrot.lane.b32.xlu0 %v276, 99
      %v278 = vpop.permute.xlu0 %277
      %vm280 = vcmask 542104
      %281 = vst.msk [vmem:[#allocation2 + $0x2] sm:$0x3] %vm280, %v278
      %vm282 = vcmask 591384
      %283 = vst.msk [vmem:[#allocation2 + $0x2] sm:$0x3] %vm282, 0
      %v284 = vld [vmem:[%s166] sm:$0xf]
      %v285 = vpack.c.bf16 %v284, %v284
      %v288 = vunpack.c.l.s4 1983009808
      %v289 = vunpack.c.0.s8 %v288
      %v290 = vlaneseq
      %v291 = vshrl.u32 %v290, 7
      %v292 = vsub.s32 %v289, %v291
      %v293 = vrot.slane %v285, %v292
      %294 = vrot.lane.b32.xlu0 %v293, 105
      %v295 = vpop.permute.xlu0 %294
      %vm297 = vcmask 722504
      %298 = vst.msk [vmem:[#allocation2 + $0x2] sm:$0x3] %vm297, %v295
      %vm299 = vcmask 771784
      %300 = vst.msk [vmem:[#allocation2 + $0x2] sm:$0x3] %vm299, 0
      %v301 = vld [vmem:[%s166] sm:$0xf]
      %v302 = vpack.c.bf16 %v301, %v301
      %v305 = vunpack.c.l.s4 1983009808
      %v306 = vunpack.c.0.s8 %v305
      %v307 = vlaneseq
      %v308 = vshrl.u32 %v307, 7
      %v309 = vsub.s32 %v306, %v308
      %v310 = vrot.slane %v302, %v309
      %311 = vrot.lane.b32.xlu0 %v310, 111
      %v312 = vpop.permute.xlu0 %311
      %vm314 = vcmask 902904
      %315 = vst.msk [vmem:[#allocation2 + $0x2] sm:$0x3] %vm314, %v312
      %vm316 = vcmask 952184
      %317 = vst.msk [vmem:[#allocation2 + $0x2] sm:$0x3] %vm316, 0
      %v318 = vld [vmem:[%s166 + $0x4] sm:$0xf]
      %v319 = vpack.c.bf16 %v318, %v318
      %v322 = vunpack.c.l.s4 1983009808
      %v323 = vunpack.c.0.s8 %v322
      %v324 = vlaneseq
      %v325 = vshrl.u32 %v324, 7
      %v326 = vsub.s32 %v323, %v325
      %v327 = vrot.slane %v319, %v326
      %328 = vrot.lane.b32.xlu0 %v327, 117
      %v329 = vpop.permute.xlu0 %328
      %v330 = vrot.slane %v329, 6
      %vm331 = vcmask 957440
      %v332 = vsel %vm331, %v330, %v329
      %vm334 = vcmask 1042344
      %vm335 = vcmask 35842
      %vm336 = vmor %vm335, %vm334
      %337 = vst.msk [vmem:[#allocation2 + $0x2] sm:$0xf] %vm336, %v332
      %vm338 = vcmask 82984
      %339 = vst.msk [vmem:[#allocation2 + $0x4] sm:$0x3] %vm338, 0
      %v340 = vld [vmem:[%s166 + $0x4] sm:$0xf]
      %v341 = vpack.c.bf16 %v340, %v340
      %v344 = vunpack.c.l.s4 1983009808
      %v345 = vunpack.c.0.s8 %v344
      %v346 = vlaneseq
      %v347 = vshrl.u32 %v346, 7
      %v348 = vsub.s32 %v345, %v347
      %v349 = vrot.slane %v341, %v348
      %350 = vrot.lane.b32.xlu0 %v349, 123
      %v351 = vpop.permute.xlu0 %350
      %vm353 = vcmask 214104
      %354 = vst.msk [vmem:[#allocation2 + $0x4] sm:$0x3] %vm353, %v351
      %vm355 = vcmask 263384
      %356 = vst.msk [vmem:[#allocation2 + $0x4] sm:$0x3] %vm355, 0
      %v357 = vld [vmem:[%s166 + $0x4] sm:$0xf]
      %v358 = vpack.c.bf16 %v357, %v357
      %v361 = vunpack.c.l.s4 1983009808
      %v362 = vunpack.c.0.s8 %v361
      %v363 = vlaneseq
      %v364 = vshrl.u32 %v363, 7
      %v365 = vsub.s32 %v362, %v364
      %v366 = vrot.slane %v358, %v365
      %367 = vrot.lane.b32.xlu0 %v366, 1
      %v368 = vpop.permute.xlu0 %367
      %vm370 = vcmask 394504
      %371 = vst.msk [vmem:[#allocation2 + $0x4] sm:$0x3] %vm370, %v368
      %vm372 = vcmask 443784
      %373 = vst.msk [vmem:[#allocation2 + $0x4] sm:$0x3] %vm372, 0
      %v374 = vld [vmem:[%s166 + $0x4] sm:$0xf]
      %v375 = vpack.c.bf16 %v374, %v374
      %v378 = vunpack.c.l.s4 1983009808
      %v379 = vunpack.c.0.s8 %v378
      %v380 = vlaneseq
      %v381 = vshrl.u32 %v380, 7
      %v382 = vsub.s32 %v379, %v381
      %v383 = vrot.slane %v375, %v382
      %384 = vrot.lane.b32.xlu0 %v383, 7
      %v385 = vpop.permute.xlu0 %384
      %vm387 = vcmask 574904
      %388 = vst.msk [vmem:[#allocation2 + $0x4] sm:$0x3] %vm387, %v385
      %vm389 = vcmask 624184
      %390 = vst.msk [vmem:[#allocation2 + $0x4] sm:$0x3] %vm389, 0
      %v391 = vld [vmem:[%s166 + $0x4] sm:$0xf]
      %v392 = vpack.c.bf16 %v391, %v391
      %v395 = vunpack.c.l.s4 1983009808
      %v396 = vunpack.c.0.s8 %v395
      %v397 = vlaneseq
      %v398 = vshrl.u32 %v397, 7
      %v399 = vsub.s32 %v396, %v398
      %v400 = vrot.slane %v392, %v399
      %401 = vrot.lane.b32.xlu0 %v400, 13
      %v402 = vpop.permute.xlu0 %401
      %vm404 = vcmask 755304
      %405 = vst.msk [vmem:[#allocation2 + $0x4] sm:$0x3] %vm404, %v402
      %vm406 = vcmask 804584
      %407 = vst.msk [vmem:[#allocation2 + $0x4] sm:$0x3] %vm406, 0
      %v408 = vld [vmem:[%s166 + $0x4] sm:$0xf]
      %v409 = vpack.c.bf16 %v408, %v408
      %v412 = vunpack.c.l.s4 1983009808
      %v413 = vunpack.c.0.s8 %v412
      %v414 = vlaneseq
      %v415 = vshrl.u32 %v414, 7
      %v416 = vsub.s32 %v413, %v415
      %v417 = vrot.slane %v409, %v416
      %418 = vrot.lane.b32.xlu0 %v417, 19
      %v419 = vpop.permute.xlu0 %418
      %vm421 = vcmask 935704
      %422 = vst.msk [vmem:[#allocation2 + $0x4] sm:$0x3] %vm421, %v419
      %vm423 = vcmask 984984
      %424 = vst.msk [vmem:[#allocation2 + $0x4] sm:$0x3] %vm423, 0
      %v425 = vld [vmem:[%s166 + $0x4] sm:$0xf]
      %v426 = vpack.c.bf16 %v425, %v425
      %v429 = vunpack.c.l.s4 1983009808
      %v430 = vunpack.c.0.s8 %v429
      %v431 = vlaneseq
      %v432 = vshrl.u32 %v431, 7
      %v433 = vsub.s32 %v430, %v432
      %v434 = vrot.slane %v426, %v433
      %435 = vrot.lane.b32.xlu0 %v434, 25
      %v436 = vpop.permute.xlu0 %435
      %v437 = vrot.slane %v436, 6
      %vm438 = vcmask 203776
      %v439 = vsel %vm438, %v437, %v436
      %vm441 = vcmask 1042376
      %vm442 = vcmask 68610
      %vm443 = vmor %vm442, %vm441
      %444 = vst.msk [vmem:[#allocation2 + $0x4] sm:$0xf] %vm443, %v439
      %vm445 = vcmask 115784
      %446 = vst.msk [vmem:[#allocation2 + $0x6] sm:$0x3] %vm445, 0
      %v447 = vld [vmem:[%s166 + $0x4] sm:$0xf]
      %v448 = vpack.c.bf16 %v447, %v447
      %v451 = vunpack.c.l.s4 1983009808
      %v452 = vunpack.c.0.s8 %v451
      %v453 = vlaneseq
      %v454 = vshrl.u32 %v453, 7
      %v455 = vsub.s32 %v452, %v454
      %v456 = vrot.slane %v448, %v455
      %457 = vrot.lane.b32.xlu0 %v456, 31
      %v458 = vpop.permute.xlu0 %457
      %vm460 = vcmask 246904
      %461 = vst.msk [vmem:[#allocation2 + $0x6] sm:$0x3] %vm460, %v458
      %vm462 = vcmask 296184
      %463 = vst.msk [vmem:[#allocation2 + $0x6] sm:$0x3] %vm462, 0
      %v464 = vld [vmem:[%s1] sm:$0xf]
      %v465 = vld [vmem:[%s1 + $0x4] sm:$0xf]
      %v466 = vld [vmem:[%s1 + $0x8] sm:$0xf]
      %v467 = vld [vmem:[%s1 + $0xc] sm:$0xf]
      %v468 = vld [vmem:[%s1 + $0x10] sm:$0xf]
      %v469 = vld [vmem:[%s1 + $0x14] sm:$0xf]
      %v470 = vld [vmem:[%s1 + $0x18] sm:$0xf]
      %v471 = vld [vmem:[#allocation2] sm:$0x3f]
      %v473 = vcombine.high %v471, %v471
      %v475 = vunpack.c.l.s4 1983009808
      %v476 = vunpack.c.0.s8 %v475
      %v477 = vlaneseq
      %v478 = vshrl.u32 %v477, 7
      %v479 = vsub.s32 %v476, %v478
      %v480 = vrot.slane %v471, %v479
      %v482 = vunpack.c.l.s4 1983009808
      %v483 = vunpack.c.0.s8 %v482
      %v484 = vlaneseq
      %v485 = vshrl.u32 %v484, 7
      %v486 = vsub.s32 %v483, %v485
      %v487 = vrot.slane %v473, %v486
      %v488 = vcombine.high %v480, %v480
      %489 = vrot.lane.b32.xlu0 %v480, 106
      %v490 = vpop.permute.xlu0 %489
      %491 = vrot.lane.b32.xlu0 %v488, 106
      %v492 = vpop.permute.xlu0 %491
      %493 = vrot.lane.b32.xlu0 %v487, 106
      %v494 = vpop.permute.xlu0 %493
      %vm495 = vcmask 867328
      %v496 = vsel %vm495, %v490, %v492
      %v497 = vsel %vm495, %v492, %v494
      %vm498 = vcmask 31744
      %v500 = vsel %vm498, %v465, 0
      %vm502 = vcmask 1041408
      %v504 = vsel %vm502, %v496, 0
      %v507 = vsel %vm502, %v497, 0
      %v510 = vsel %vm502, %v494, 0
      %512 = vmatprep.subr.bf16.mxu0 %v507
      %513 = vmatpush1.bf16.msra.mxu0 %v504
      %514 = vmatprep.subr.bf16.mxu0 0
      %515 = vmatpush1.bf16.msra.mxu0 0
      %516 = vmatprep.subr.bf16.mxu0 0
      %517 = vmatpush1.bf16.msra.mxu0 0
      %518 = vmatprep.subr.bf16.mxu0 0
      %519 = vmatpush1.bf16.msra.mxu0 0
      %520 = vmatprep.subr.bf16.mxu0 0
      %521 = vmatpush1.bf16.msra.mxu0 0
      %522 = vmatprep.subr.bf16.mxu0 0
      %523 = vmatpush1.bf16.msra.mxu0 0
      %524 = vmatprep.subr.bf16.mxu0 0
      %525 = vmatpush1.bf16.msra.mxu0 0
      %526 = vmatprep.subr.bf16.mxu0 0
      %527 = vmatpush1.bf16.msra.mxu0 0
      %528 = vmatprep.subr.bf16.mxu0 0
      %529 = vmatpush1.bf16.msra.mxu0 0
      %530 = vmatprep.subr.bf16.mxu0 0
      %531 = vmatpush1.bf16.msra.mxu0 0
      %532 = vmatprep.subr.bf16.mxu0 0
      %533 = vmatpush1.bf16.msra.mxu0 0
      %534 = vmatprep.subr.bf16.mxu0 0
      %535 = vmatpush1.bf16.msra.mxu0 0
      %536 = vmatprep.subr.bf16.mxu0 0
      %537 = vmatpush1.bf16.msra.mxu0 0
      %538 = vmatprep.subr.bf16.mxu0 0
      %539 = vmatpush1.bf16.msra.mxu0 0
      %540 = vmatprep.subr.bf16.mxu0 0
      %541 = vmatpush1.bf16.msra.mxu0 0
      %542 = vmatprep.subr.bf16.mxu0 0
      %543 = vmatpush1.bf16.msra.mxu0 0
      %544 = vmatprep.mubr.bf16.mxu0 0
      %545 = vmatmul.mubr.bf16.gmra.mrb[0].mxu0 %v500
      %v546 = vpop.f32.mrb[0].mxu0
      %v547 = vadd.f32 0.0, %v546
      %v548 = vpop.f32.mrb[0].mxu0
      %v549 = vadd.f32 0.0, %v548
      %v550 = vpop.f32.mrb[0].mxu0
      %v551 = vpop.f32.mrb[0].mxu0
      %552 = vdwg.mxu0
      %553 = vmatprep.subr.bf16.mxu0 0
      %554 = vmatpush1.bf16.msra.mxu0 %v510
      %555 = vmatprep.subr.bf16.mxu0 0
      %556 = vmatpush1.bf16.msra.mxu0 0
      %557 = vmatprep.subr.bf16.mxu0 0
      %558 = vmatpush1.bf16.msra.mxu0 0
      %559 = vmatprep.subr.bf16.mxu0 0
      %560 = vmatpush1.bf16.msra.mxu0 0
      %561 = vmatprep.subr.bf16.mxu0 0
      %562 = vmatpush1.bf16.msra.mxu0 0
      %563 = vmatprep.subr.bf16.mxu0 0
      %564 = vmatpush1.bf16.msra.mxu0 0
      %565 = vmatprep.subr.bf16.mxu0 0
      %566 = vmatpush1.bf16.msra.mxu0 0
      %567 = vmatprep.subr.bf16.mxu0 0
      %568 = vmatpush1.bf16.msra.mxu0 0
      %569 = vmatprep.subr.bf16.mxu0 0
      %570 = vmatpush1.bf16.msra.mxu0 0
      %571 = vmatprep.subr.bf16.mxu0 0
      %572 = vmatpush1.bf16.msra.mxu0 0
      %573 = vmatprep.subr.bf16.mxu0 0
      %574 = vmatpush1.bf16.msra.mxu0 0
      %575 = vmatprep.subr.bf16.mxu0 0
      %576 = vmatpush1.bf16.msra.mxu0 0
      %577 = vmatprep.subr.bf16.mxu0 0
      %578 = vmatpush1.bf16.msra.mxu0 0
      %579 = vmatprep.subr.bf16.mxu0 0
      %580 = vmatpush1.bf16.msra.mxu0 0
      %581 = vmatprep.subr.bf16.mxu0 0
      %582 = vmatpush1.bf16.msra.mxu0 0
      %583 = vmatprep.subr.bf16.mxu0 0
      %584 = vmatpush1.bf16.msra.mxu0 0
      %585 = vmatprep.mubr.bf16.mxu0 0
      %586 = vmatmul.mubr.bf16.gmra.mrb[0].mxu0 %v500
      %v587 = vpop.f32.mrb[0].mxu0
      %v588 = vadd.f32 0.0, %v587
      %v589 = vpop.f32.mrb[0].mxu0
      %v590 = vpop.f32.mrb[0].mxu0
      %v591 = vpop.f32.mrb[0].mxu0
      %592 = vdwg.mxu0
      %v594 = vsel %vm498, %v464, 0
      %v597 = vsel %vm502, %v480, 0
      %v600 = vsel %vm502, %v488, 0
      %v603 = vsel %vm502, %v487, 0
      %605 = vmatprep.subr.bf16.mxu0 %v600
      %606 = vmatpush1.bf16.msra.mxu0 %v597
      %607 = vmatprep.subr.bf16.mxu0 0
      %608 = vmatpush1.bf16.msra.mxu0 0
      %609 = vmatprep.subr.bf16.mxu0 0
      %610 = vmatpush1.bf16.msra.mxu0 0
      %611 = vmatprep.subr.bf16.mxu0 0
      %612 = vmatpush1.bf16.msra.mxu0 0
      %613 = vmatprep.subr.bf16.mxu0 0
      %614 = vmatpush1.bf16.msra.mxu0 0
      %615 = vmatprep.subr.bf16.mxu0 0
      %616 = vmatpush1.bf16.msra.mxu0 0
      %617 = vmatprep.subr.bf16.mxu0 0
      %618 = vmatpush1.bf16.msra.mxu0 0
      %619 = vmatprep.subr.bf16.mxu0 0
      %620 = vmatpush1.bf16.msra.mxu0 0
      %621 = vmatprep.subr.bf16.mxu0 0
      %622 = vmatpush1.bf16.msra.mxu0 0
      %623 = vmatprep.subr.bf16.mxu0 0
      %624 = vmatpush1.bf16.msra.mxu0 0
      %625 = vmatprep.subr.bf16.mxu0 0
      %626 = vmatpush1.bf16.msra.mxu0 0
      %627 = vmatprep.subr.bf16.mxu0 0
      %628 = vmatpush1.bf16.msra.mxu0 0
      %629 = vmatprep.subr.bf16.mxu0 0
      %630 = vmatpush1.bf16.msra.mxu0 0
      %631 = vmatprep.subr.bf16.mxu0 0
      %632 = vmatpush1.bf16.msra.mxu0 0
      %633 = vmatprep.subr.bf16.mxu0 0
      %634 = vmatpush1.bf16.msra.mxu0 0
      %635 = vmatprep.subr.bf16.mxu0 0
      %636 = vmatpush1.bf16.msra.mxu0 0
      %637 = vmatprep.mubr.bf16.mxu0 0
      %638 = vmatmul.mubr.bf16.gmra.mrb[0].mxu0 %v594
      %v639 = vpop.f32.mrb[0].mxu0
      %v640 = vadd.f32 %v547, %v639
      %v641 = vpop.f32.mrb[0].mxu0
      %v642 = vadd.f32 %v549, %v641
      %v643 = vpop.f32.mrb[0].mxu0
      %v644 = vpop.f32.mrb[0].mxu0
      %645 = vdwg.mxu0
      %646 = vmatprep.subr.bf16.mxu0 0
      %647 = vmatpush1.bf16.msra.mxu0 %v603
      %648 = vmatprep.subr.bf16.mxu0 0
      %649 = vmatpush1.bf16.msra.mxu0 0
      %650 = vmatprep.subr.bf16.mxu0 0
      %651 = vmatpush1.bf16.msra.mxu0 0
      %652 = vmatprep.subr.bf16.mxu0 0
      %653 = vmatpush1.bf16.msra.mxu0 0
      %654 = vmatprep.subr.bf16.mxu0 0
      %655 = vmatpush1.bf16.msra.mxu0 0
      %656 = vmatprep.subr.bf16.mxu0 0
      %657 = vmatpush1.bf16.msra.mxu0 0
      %658 = vmatprep.subr.bf16.mxu0 0
      %659 = vmatpush1.bf16.msra.mxu0 0
      %660 = vmatprep.subr.bf16.mxu0 0
      %661 = vmatpush1.bf16.msra.mxu0 0
      %662 = vmatprep.subr.bf16.mxu0 0
      %663 = vmatpush1.bf16.msra.mxu0 0
      %664 = vmatprep.subr.bf16.mxu0 0
      %665 = vmatpush1.bf16.msra.mxu0 0
      %666 = vmatprep.subr.bf16.mxu0 0
      %667 = vmatpush1.bf16.msra.mxu0 0
      %668 = vmatprep.subr.bf16.mxu0 0
      %669 = vmatpush1.bf16.msra.mxu0 0
      %670 = vmatprep.subr.bf16.mxu0 0
      %671 = vmatpush1.bf16.msra.mxu0 0
      %672 = vmatprep.subr.bf16.mxu0 0
      %673 = vmatpush1.bf16.msra.mxu0 0
      %674 = vmatprep.subr.bf16.mxu0 0
      %675 = vmatpush1.bf16.msra.mxu0 0
      %676 = vmatprep.subr.bf16.mxu0 0
      %677 = vmatpush1.bf16.msra.mxu0 0
      %678 = vmatprep.mubr.bf16.mxu0 0
      %679 = vmatmul.mubr.bf16.gmra.mrb[0].mxu0 %v594
      %v680 = vpop.f32.mrb[0].mxu0
      %v681 = vadd.f32 %v588, %v680
      %v682 = vpop.f32.mrb[0].mxu0
      %v683 = vpop.f32.mrb[0].mxu0
      %v684 = vpop.f32.mrb[0].mxu0
      %685 = vdwg.mxu0
      %v686 = vld [vmem:[#allocation2] sm:$0xff]
      %v688 = vcombine.high %v686, %v686
      %v690 = vunpack.c.l.s4 1983009808
      %v691 = vunpack.c.0.s8 %v690
      %v692 = vlaneseq
      %v693 = vshrl.u32 %v692, 7
      %v694 = vsub.s32 %v691, %v693
      %v695 = vrot.slane %v686, %v694
      %v697 = vunpack.c.l.s4 1983009808
      %v698 = vunpack.c.0.s8 %v697
      %v699 = vlaneseq
      %v700 = vshrl.u32 %v699, 7
      %v701 = vsub.s32 %v698, %v700
      %v702 = vrot.slane %v688, %v701
      %v703 = vcombine.high %v695, %v695
      %v704 = vcombine.high %v702, %v702
      %705 = vrot.lane.b32.xlu0 %v695, 84
      %v706 = vpop.permute.xlu0 %705
      %707 = vrot.lane.b32.xlu0 %v703, 84
      %v708 = vpop.permute.xlu0 %707
      %709 = vrot.lane.b32.xlu0 %v702, 84
      %v710 = vpop.permute.xlu0 %709
      %711 = vrot.lane.b32.xlu0 %v704, 84
      %v712 = vpop.permute.xlu0 %711
      %vm713 = vcmask 687104
      %v714 = vsel %vm713, %v706, %v708
      %v715 = vsel %vm713, %v708, %v710
      %v716 = vsel %vm713, %v710, %v712
      %v718 = vsel %vm498, %v466, 0
      %v721 = vsel %vm502, %v714, 0
      %v724 = vsel %vm502, %v715, 0
      %v727 = vsel %vm502, %v716, 0
      %729 = vmatprep.subr.bf16.mxu0 %v724
      %730 = vmatpush1.bf16.msra.mxu0 %v721
      %731 = vmatprep.subr.bf16.mxu0 0
      %732 = vmatpush1.bf16.msra.mxu0 0
      %733 = vmatprep.subr.bf16.mxu0 0
      %734 = vmatpush1.bf16.msra.mxu0 0
      %735 = vmatprep.subr.bf16.mxu0 0
      %736 = vmatpush1.bf16.msra.mxu0 0
      %737 = vmatprep.subr.bf16.mxu0 0
      %738 = vmatpush1.bf16.msra.mxu0 0
      %739 = vmatprep.subr.bf16.mxu0 0
      %740 = vmatpush1.bf16.msra.mxu0 0
      %741 = vmatprep.subr.bf16.mxu0 0
      %742 = vmatpush1.bf16.msra.mxu0 0
      %743 = vmatprep.subr.bf16.mxu0 0
      %744 = vmatpush1.bf16.msra.mxu0 0
      %745 = vmatprep.subr.bf16.mxu0 0
      %746 = vmatpush1.bf16.msra.mxu0 0
      %747 = vmatprep.subr.bf16.mxu0 0
      %748 = vmatpush1.bf16.msra.mxu0 0
      %749 = vmatprep.subr.bf16.mxu0 0
      %750 = vmatpush1.bf16.msra.mxu0 0
      %751 = vmatprep.subr.bf16.mxu0 0
      %752 = vmatpush1.bf16.msra.mxu0 0
      %753 = vmatprep.subr.bf16.mxu0 0
      %754 = vmatpush1.bf16.msra.mxu0 0
      %755 = vmatprep.subr.bf16.mxu0 0
      %756 = vmatpush1.bf16.msra.mxu0 0
      %757 = vmatprep.subr.bf16.mxu0 0
      %758 = vmatpush1.bf16.msra.mxu0 0
      %759 = vmatprep.subr.bf16.mxu0 0
      %760 = vmatpush1.bf16.msra.mxu0 0
      %761 = vmatprep.mubr.bf16.mxu0 0
      %762 = vmatmul.mubr.bf16.gmra.mrb[0].mxu0 %v718
      %v763 = vpop.f32.mrb[0].mxu0
      %v764 = vadd.f32 0.0, %v763
      %v765 = vpop.f32.mrb[0].mxu0
      %v766 = vadd.f32 0.0, %v765
      %v767 = vpop.f32.mrb[0].mxu0
      %v768 = vpop.f32.mrb[0].mxu0
      %769 = vdwg.mxu0
      %770 = vmatprep.subr.bf16.mxu0 0
      %771 = vmatpush1.bf16.msra.mxu0 %v727
      %772 = vmatprep.subr.bf16.mxu0 0
      %773 = vmatpush1.bf16.msra.mxu0 0
      %774 = vmatprep.subr.bf16.mxu0 0
      %775 = vmatpush1.bf16.msra.mxu0 0
      %776 = vmatprep.subr.bf16.mxu0 0
      %777 = vmatpush1.bf16.msra.mxu0 0
      %778 = vmatprep.subr.bf16.mxu0 0
      %779 = vmatpush1.bf16.msra.mxu0 0
      %780 = vmatprep.subr.bf16.mxu0 0
      %781 = vmatpush1.bf16.msra.mxu0 0
      %782 = vmatprep.subr.bf16.mxu0 0
      %783 = vmatpush1.bf16.msra.mxu0 0
      %784 = vmatprep.subr.bf16.mxu0 0
      %785 = vmatpush1.bf16.msra.mxu0 0
      %786 = vmatprep.subr.bf16.mxu0 0
      %787 = vmatpush1.bf16.msra.mxu0 0
      %788 = vmatprep.subr.bf16.mxu0 0
      %789 = vmatpush1.bf16.msra.mxu0 0
      %790 = vmatprep.subr.bf16.mxu0 0
      %791 = vmatpush1.bf16.msra.mxu0 0
      %792 = vmatprep.subr.bf16.mxu0 0
      %793 = vmatpush1.bf16.msra.mxu0 0
      %794 = vmatprep.subr.bf16.mxu0 0
      %795 = vmatpush1.bf16.msra.mxu0 0
      %796 = vmatprep.subr.bf16.mxu0 0
      %797 = vmatpush1.bf16.msra.mxu0 0
      %798 = vmatprep.subr.bf16.mxu0 0
      %799 = vmatpush1.bf16.msra.mxu0 0
      %800 = vmatprep.subr.bf16.mxu0 0
      %801 = vmatpush1.bf16.msra.mxu0 0
      %802 = vmatprep.mubr.bf16.mxu0 0
      %803 = vmatmul.mubr.bf16.gmra.mrb[0].mxu0 %v718
      %v804 = vpop.f32.mrb[0].mxu0
      %v805 = vadd.f32 0.0, %v804
      %v806 = vpop.f32.mrb[0].mxu0
      %v807 = vpop.f32.mrb[0].mxu0
      %v808 = vpop.f32.mrb[0].mxu0
      %809 = vdwg.mxu0
      %v810 = vadd.f32 %v640, %v764
      %v811 = vadd.f32 %v642, %v766
      %v812 = vadd.f32 %v681, %v805
      %v813 = vld [vmem:[#allocation2] sm:$0xff]
      %v815 = vcombine.high %v813, %v813
      %v817 = vunpack.c.l.s4 1983009808
      %v818 = vunpack.c.0.s8 %v817
      %v819 = vlaneseq
      %v820 = vshrl.u32 %v819, 7
      %v821 = vsub.s32 %v818, %v820
      %v822 = vrot.slane %v813, %v821
      %v824 = vunpack.c.l.s4 1983009808
      %v825 = vunpack.c.0.s8 %v824
      %v826 = vlaneseq
      %v827 = vshrl.u32 %v826, 7
      %v828 = vsub.s32 %v825, %v827
      %v829 = vrot.slane %v815, %v828
      %v830 = vcombine.high %v822, %v822
      %v831 = vcombine.high %v829, %v829
      %832 = vrot.lane.b32.xlu0 %v822, 62
      %v833 = vpop.permute.xlu0 %832
      %834 = vrot.lane.b32.xlu0 %v830, 62
      %v835 = vpop.permute.xlu0 %834
      %836 = vrot.lane.b32.xlu0 %v829, 62
      %v837 = vpop.permute.xlu0 %836
      %838 = vrot.lane.b32.xlu0 %v831, 62
      %v839 = vpop.permute.xlu0 %838
      %vm840 = vcmask 506880
      %v841 = vsel %vm840, %v833, %v835
      %v842 = vsel %vm840, %v835, %v837
      %v843 = vsel %vm840, %v837, %v839
      %v845 = vsel %vm498, %v467, 0
      %v848 = vsel %vm502, %v841, 0
      %v851 = vsel %vm502, %v842, 0
      %v854 = vsel %vm502, %v843, 0
      %856 = vmatprep.subr.bf16.mxu0 %v851
      %857 = vmatpush1.bf16.msra.mxu0 %v848
      %858 = vmatprep.subr.bf16.mxu0 0
      %859 = vmatpush1.bf16.msra.mxu0 0
      %860 = vmatprep.subr.bf16.mxu0 0
      %861 = vmatpush1.bf16.msra.mxu0 0
      %862 = vmatprep.subr.bf16.mxu0 0
      %863 = vmatpush1.bf16.msra.mxu0 0
      %864 = vmatprep.subr.bf16.mxu0 0
      %865 = vmatpush1.bf16.msra.mxu0 0
      %866 = vmatprep.subr.bf16.mxu0 0
      %867 = vmatpush1.bf16.msra.mxu0 0
      %868 = vmatprep.subr.bf16.mxu0 0
      %869 = vmatpush1.bf16.msra.mxu0 0
      %870 = vmatprep.subr.bf16.mxu0 0
      %871 = vmatpush1.bf16.msra.mxu0 0
      %872 = vmatprep.subr.bf16.mxu0 0
      %873 = vmatpush1.bf16.msra.mxu0 0
      %874 = vmatprep.subr.bf16.mxu0 0
      %875 = vmatpush1.bf16.msra.mxu0 0
      %876 = vmatprep.subr.bf16.mxu0 0
      %877 = vmatpush1.bf16.msra.mxu0 0
      %878 = vmatprep.subr.bf16.mxu0 0
      %879 = vmatpush1.bf16.msra.mxu0 0
      %880 = vmatprep.subr.bf16.mxu0 0
      %881 = vmatpush1.bf16.msra.mxu0 0
      %882 = vmatprep.subr.bf16.mxu0 0
      %883 = vmatpush1.bf16.msra.mxu0 0
      %884 = vmatprep.subr.bf16.mxu0 0
      %885 = vmatpush1.bf16.msra.mxu0 0
      %886 = vmatprep.subr.bf16.mxu0 0
      %887 = vmatpush1.bf16.msra.mxu0 0
      %888 = vmatprep.mubr.bf16.mxu0 0
      %889 = vmatmul.mubr.bf16.gmra.mrb[0].mxu0 %v845
      %v890 = vpop.f32.mrb[0].mxu0
      %v891 = vadd.f32 0.0, %v890
      %v892 = vpop.f32.mrb[0].mxu0
      %v893 = vadd.f32 0.0, %v892
      %v894 = vpop.f32.mrb[0].mxu0
      %v895 = vpop.f32.mrb[0].mxu0
      %896 = vdwg.mxu0
      %897 = vmatprep.subr.bf16.mxu0 0
      %898 = vmatpush1.bf16.msra.mxu0 %v854
      %899 = vmatprep.subr.bf16.mxu0 0
      %900 = vmatpush1.bf16.msra.mxu0 0
      %901 = vmatprep.subr.bf16.mxu0 0
      %902 = vmatpush1.bf16.msra.mxu0 0
      %903 = vmatprep.subr.bf16.mxu0 0
      %904 = vmatpush1.bf16.msra.mxu0 0
      %905 = vmatprep.subr.bf16.mxu0 0
      %906 = vmatpush1.bf16.msra.mxu0 0
      %907 = vmatprep.subr.bf16.mxu0 0
      %908 = vmatpush1.bf16.msra.mxu0 0
      %909 = vmatprep.subr.bf16.mxu0 0
      %910 = vmatpush1.bf16.msra.mxu0 0
      %911 = vmatprep.subr.bf16.mxu0 0
      %912 = vmatpush1.bf16.msra.mxu0 0
      %913 = vmatprep.subr.bf16.mxu0 0
      %914 = vmatpush1.bf16.msra.mxu0 0
      %915 = vmatprep.subr.bf16.mxu0 0
      %916 = vmatpush1.bf16.msra.mxu0 0
      %917 = vmatprep.subr.bf16.mxu0 0
      %918 = vmatpush1.bf16.msra.mxu0 0
      %919 = vmatprep.subr.bf16.mxu0 0
      %920 = vmatpush1.bf16.msra.mxu0 0
      %921 = vmatprep.subr.bf16.mxu0 0
      %922 = vmatpush1.bf16.msra.mxu0 0
      %923 = vmatprep.subr.bf16.mxu0 0
      %924 = vmatpush1.bf16.msra.mxu0 0
      %925 = vmatprep.subr.bf16.mxu0 0
      %926 = vmatpush1.bf16.msra.mxu0 0
      %927 = vmatprep.subr.bf16.mxu0 0
      %928 = vmatpush1.bf16.msra.mxu0 0
      %929 = vmatprep.mubr.bf16.mxu0 0
      %930 = vmatmul.mubr.bf16.gmra.mrb[0].mxu0 %v845
      %v931 = vpop.f32.mrb[0].mxu0
      %v932 = vadd.f32 0.0, %v931
      %v933 = vpop.f32.mrb[0].mxu0
      %v934 = vpop.f32.mrb[0].mxu0
      %v935 = vpop.f32.mrb[0].mxu0
      %936 = vdwg.mxu0
      %v937 = vadd.f32 %v810, %v891
      %v938 = vadd.f32 %v811, %v893
      %v939 = vadd.f32 %v812, %v932
      %v940 = vld [vmem:[#allocation2] sm:$0xff]
      %v942 = vcombine.high %v940, %v940
      %v944 = vunpack.c.l.s4 1983009808
      %v945 = vunpack.c.0.s8 %v944
      %v946 = vlaneseq
      %v947 = vshrl.u32 %v946, 7
      %v948 = vsub.s32 %v945, %v947
      %v949 = vrot.slane %v940, %v948
      %v951 = vunpack.c.l.s4 1983009808
      %v952 = vunpack.c.0.s8 %v951
      %v953 = vlaneseq
      %v954 = vshrl.u32 %v953, 7
      %v955 = vsub.s32 %v952, %v954
      %v956 = vrot.slane %v942, %v955
      %v957 = vcombine.high %v949, %v949
      %v958 = vcombine.high %v956, %v956
      %959 = vrot.lane.b32.xlu0 %v949, 40
      %v960 = vpop.permute.xlu0 %959
      %961 = vrot.lane.b32.xlu0 %v957, 40
      %v962 = vpop.permute.xlu0 %961
      %963 = vrot.lane.b32.xlu0 %v956, 40
      %v964 = vpop.permute.xlu0 %963
      %965 = vrot.lane.b32.xlu0 %v958, 40
      %v966 = vpop.permute.xlu0 %965
      %vm967 = vcmask 326656
      %v968 = vsel %vm967, %v960, %v962
      %v969 = vsel %vm967, %v962, %v964
      %v970 = vsel %vm967, %v964, %v966
      %v972 = vsel %vm498, %v468, 0
      %v975 = vsel %vm502, %v968, 0
      %v978 = vsel %vm502, %v969, 0
      %v981 = vsel %vm502, %v970, 0
      %983 = vmatprep.subr.bf16.mxu0 %v978
      %984 = vmatpush1.bf16.msra.mxu0 %v975
      %985 = vmatprep.subr.bf16.mxu0 0
      %986 = vmatpush1.bf16.msra.mxu0 0
      %987 = vmatprep.subr.bf16.mxu0 0
      %988 = vmatpush1.bf16.msra.mxu0 0
      %989 = vmatprep.subr.bf16.mxu0 0
      %990 = vmatpush1.bf16.msra.mxu0 0
      %991 = vmatprep.subr.bf16.mxu0 0
      %992 = vmatpush1.bf16.msra.mxu0 0
      %993 = vmatprep.subr.bf16.mxu0 0
      %994 = vmatpush1.bf16.msra.mxu0 0
      %995 = vmatprep.subr.bf16.mxu0 0
      %996 = vmatpush1.bf16.msra.mxu0 0
      %997 = vmatprep.subr.bf16.mxu0 0
      %998 = vmatpush1.bf16.msra.mxu0 0
      %999 = vmatprep.subr.bf16.mxu0 0
      %1000 = vmatpush1.bf16.msra.mxu0 0
      %1001 = vmatprep.subr.bf16.mxu0 0
      %1002 = vmatpush1.bf16.msra.mxu0 0
      %1003 = vmatprep.subr.bf16.mxu0 0
      %1004 = vmatpush1.bf16.msra.mxu0 0
      %1005 = vmatprep.subr.bf16.mxu0 0
      %1006 = vmatpush1.bf16.msra.mxu0 0
      %1007 = vmatprep.subr.bf16.mxu0 0
      %1008 = vmatpush1.bf16.msra.mxu0 0
      %1009 = vmatprep.subr.bf16.mxu0 0
      %1010 = vmatpush1.bf16.msra.mxu0 0
      %1011 = vmatprep.subr.bf16.mxu0 0
      %1012 = vmatpush1.bf16.msra.mxu0 0
      %1013 = vmatprep.subr.bf16.mxu0 0
      %1014 = vmatpush1.bf16.msra.mxu0 0
      %1015 = vmatprep.mubr.bf16.mxu0 0
      %1016 = vmatmul.mubr.bf16.gmra.mrb[0].mxu0 %v972
      %v1017 = vpop.f32.mrb[0].mxu0
      %v1018 = vadd.f32 0.0, %v1017
      %v1019 = vpop.f32.mrb[0].mxu0
      %v1020 = vadd.f32 0.0, %v1019
      %v1021 = vpop.f32.mrb[0].mxu0
      %v1022 = vpop.f32.mrb[0].mxu0
      %1023 = vdwg.mxu0
      %1024 = vmatprep.subr.bf16.mxu0 0
      %1025 = vmatpush1.bf16.msra.mxu0 %v981
      %1026 = vmatprep.subr.bf16.mxu0 0
      %1027 = vmatpush1.bf16.msra.mxu0 0
      %1028 = vmatprep.subr.bf16.mxu0 0
      %1029 = vmatpush1.bf16.msra.mxu0 0
      %1030 = vmatprep.subr.bf16.mxu0 0
      %1031 = vmatpush1.bf16.msra.mxu0 0
      %1032 = vmatprep.subr.bf16.mxu0 0
      %1033 = vmatpush1.bf16.msra.mxu0 0
      %1034 = vmatprep.subr.bf16.mxu0 0
      %1035 = vmatpush1.bf16.msra.mxu0 0
      %1036 = vmatprep.subr.bf16.mxu0 0
      %1037 = vmatpush1.bf16.msra.mxu0 0
      %1038 = vmatprep.subr.bf16.mxu0 0
      %1039 = vmatpush1.bf16.msra.mxu0 0
      %1040 = vmatprep.subr.bf16.mxu0 0
      %1041 = vmatpush1.bf16.msra.mxu0 0
      %1042 = vmatprep.subr.bf16.mxu0 0
      %1043 = vmatpush1.bf16.msra.mxu0 0
      %1044 = vmatprep.subr.bf16.mxu0 0
      %1045 = vmatpush1.bf16.msra.mxu0 0
      %1046 = vmatprep.subr.bf16.mxu0 0
      %1047 = vmatpush1.bf16.msra.mxu0 0
      %1048 = vmatprep.subr.bf16.mxu0 0
      %1049 = vmatpush1.bf16.msra.mxu0 0
      %1050 = vmatprep.subr.bf16.mxu0 0
      %1051 = vmatpush1.bf16.msra.mxu0 0
      %1052 = vmatprep.subr.bf16.mxu0 0
      %1053 = vmatpush1.bf16.msra.mxu0 0
      %1054 = vmatprep.subr.bf16.mxu0 0
      %1055 = vmatpush1.bf16.msra.mxu0 0
      %1056 = vmatprep.mubr.bf16.mxu0 0
      %1057 = vmatmul.mubr.bf16.gmra.mrb[0].mxu0 %v972
      %v1058 = vpop.f32.mrb[0].mxu0
      %v1059 = vadd.f32 0.0, %v1058
      %v1060 = vpop.f32.mrb[0].mxu0
      %v1061 = vpop.f32.mrb[0].mxu0
      %v1062 = vpop.f32.mrb[0].mxu0
      %1063 = vdwg.mxu0
      %v1064 = vadd.f32 %v937, %v1018
      %v1065 = vadd.f32 %v938, %v1020
      %v1066 = vadd.f32 %v939, %v1059
      %v1067 = vld [vmem:[#allocation2] sm:$0xff]
      %v1069 = vcombine.high %v1067, %v1067
      %v1071 = vunpack.c.l.s4 1983009808
      %v1072 = vunpack.c.0.s8 %v1071
      %v1073 = vlaneseq
      %v1074 = vshrl.u32 %v1073, 7
      %v1075 = vsub.s32 %v1072, %v1074
      %v1076 = vrot.slane %v1067, %v1075
      %v1078 = vunpack.c.l.s4 1983009808
      %v1079 = vunpack.c.0.s8 %v1078
      %v1080 = vlaneseq
      %v1081 = vshrl.u32 %v1080, 7
      %v1082 = vsub.s32 %v1079, %v1081
      %v1083 = vrot.slane %v1069, %v1082
      %v1084 = vcombine.high %v1076, %v1076
      %v1085 = vcombine.high %v1083, %v1083
      %1086 = vrot.lane.b32.xlu0 %v1076, 18
      %v1087 = vpop.permute.xlu0 %1086
      %1088 = vrot.lane.b32.xlu0 %v1084, 18
      %v1089 = vpop.permute.xlu0 %1088
      %1090 = vrot.lane.b32.xlu0 %v1083, 18
      %v1091 = vpop.permute.xlu0 %1090
      %1092 = vrot.lane.b32.xlu0 %v1085, 18
      %v1093 = vpop.permute.xlu0 %1092
      %vm1094 = vcmask 146432
      %v1095 = vsel %vm1094, %v1087, %v1089
      %v1096 = vsel %vm1094, %v1089, %v1091
      %v1097 = vsel %vm1094, %v1091, %v1093
      %v1099 = vsel %vm498, %v469, 0
      %v1102 = vsel %vm502, %v1095, 0
      %v1105 = vsel %vm502, %v1096, 0
      %v1108 = vsel %vm502, %v1097, 0
      %1110 = vmatprep.subr.bf16.mxu0 %v1105
      %1111 = vmatpush1.bf16.msra.mxu0 %v1102
      %1112 = vmatprep.subr.bf16.mxu0 0
      %1113 = vmatpush1.bf16.msra.mxu0 0
      %1114 = vmatprep.subr.bf16.mxu0 0
      %1115 = vmatpush1.bf16.msra.mxu0 0
      %1116 = vmatprep.subr.bf16.mxu0 0
      %1117 = vmatpush1.bf16.msra.mxu0 0
      %1118 = vmatprep.subr.bf16.mxu0 0
      %1119 = vmatpush1.bf16.msra.mxu0 0
      %1120 = vmatprep.subr.bf16.mxu0 0
      %1121 = vmatpush1.bf16.msra.mxu0 0
      %1122 = vmatprep.subr.bf16.mxu0 0
      %1123 = vmatpush1.bf16.msra.mxu0 0
      %1124 = vmatprep.subr.bf16.mxu0 0
      %1125 = vmatpush1.bf16.msra.mxu0 0
      %1126 = vmatprep.subr.bf16.mxu0 0
      %1127 = vmatpush1.bf16.msra.mxu0 0
      %1128 = vmatprep.subr.bf16.mxu0 0
      %1129 = vmatpush1.bf16.msra.mxu0 0
      %1130 = vmatprep.subr.bf16.mxu0 0
      %1131 = vmatpush1.bf16.msra.mxu0 0
      %1132 = vmatprep.subr.bf16.mxu0 0
      %1133 = vmatpush1.bf16.msra.mxu0 0
      %1134 = vmatprep.subr.bf16.mxu0 0
      %1135 = vmatpush1.bf16.msra.mxu0 0
      %1136 = vmatprep.subr.bf16.mxu0 0
      %1137 = vmatpush1.bf16.msra.mxu0 0
      %1138 = vmatprep.subr.bf16.mxu0 0
      %1139 = vmatpush1.bf16.msra.mxu0 0
      %1140 = vmatprep.subr.bf16.mxu0 0
      %1141 = vmatpush1.bf16.msra.mxu0 0
      %1142 = vmatprep.mubr.bf16.mxu0 0
      %1143 = vmatmul.mubr.bf16.gmra.mrb[0].mxu0 %v1099
      %v1144 = vpop.f32.mrb[0].mxu0
      %v1145 = vadd.f32 0.0, %v1144
      %v1146 = vpop.f32.mrb[0].mxu0
      %v1147 = vadd.f32 0.0, %v1146
      %v1148 = vpop.f32.mrb[0].mxu0
      %v1149 = vpop.f32.mrb[0].mxu0
      %1150 = vdwg.mxu0
      %1151 = vmatprep.subr.bf16.mxu0 0
      %1152 = vmatpush1.bf16.msra.mxu0 %v1108
      %1153 = vmatprep.subr.bf16.mxu0 0
      %1154 = vmatpush1.bf16.msra.mxu0 0
      %1155 = vmatprep.subr.bf16.mxu0 0
      %1156 = vmatpush1.bf16.msra.mxu0 0
      %1157 = vmatprep.subr.bf16.mxu0 0
      %1158 = vmatpush1.bf16.msra.mxu0 0
      %1159 = vmatprep.subr.bf16.mxu0 0
      %1160 = vmatpush1.bf16.msra.mxu0 0
      %1161 = vmatprep.subr.bf16.mxu0 0
      %1162 = vmatpush1.bf16.msra.mxu0 0
      %1163 = vmatprep.subr.bf16.mxu0 0
      %1164 = vmatpush1.bf16.msra.mxu0 0
      %1165 = vmatprep.subr.bf16.mxu0 0
      %1166 = vmatpush1.bf16.msra.mxu0 0
      %1167 = vmatprep.subr.bf16.mxu0 0
      %1168 = vmatpush1.bf16.msra.mxu0 0
      %1169 = vmatprep.subr.bf16.mxu0 0
      %1170 = vmatpush1.bf16.msra.mxu0 0
      %1171 = vmatprep.subr.bf16.mxu0 0
      %1172 = vmatpush1.bf16.msra.mxu0 0
      %1173 = vmatprep.subr.bf16.mxu0 0
      %1174 = vmatpush1.bf16.msra.mxu0 0
      %1175 = vmatprep.subr.bf16.mxu0 0
      %1176 = vmatpush1.bf16.msra.mxu0 0
      %1177 = vmatprep.subr.bf16.mxu0 0
      %1178 = vmatpush1.bf16.msra.mxu0 0
      %1179 = vmatprep.subr.bf16.mxu0 0
      %1180 = vmatpush1.bf16.msra.mxu0 0
      %1181 = vmatprep.subr.bf16.mxu0 0
      %1182 = vmatpush1.bf16.msra.mxu0 0
      %1183 = vmatprep.mubr.bf16.mxu0 0
      %1184 = vmatmul.mubr.bf16.gmra.mrb[0].mxu0 %v1099
      %v1185 = vpop.f32.mrb[0].mxu0
      %v1186 = vadd.f32 0.0, %v1185
      %v1187 = vpop.f32.mrb[0].mxu0
      %v1188 = vpop.f32.mrb[0].mxu0
      %v1189 = vpop.f32.mrb[0].mxu0
      %1190 = vdwg.mxu0
      %v1191 = vadd.f32 %v1064, %v1145
      %v1192 = vadd.f32 %v1065, %v1147
      %v1193 = vadd.f32 %v1066, %v1186
      %v1194 = vld [vmem:[#allocation2 + $0x2] sm:$0x3f]
      %v1196 = vcombine.high %v1194, %v1194
      %v1198 = vunpack.c.l.s4 1983009808
      %v1199 = vunpack.c.0.s8 %v1198
      %v1200 = vlaneseq
      %v1201 = vshrl.u32 %v1200, 7
      %v1202 = vsub.s32 %v1199, %v1201
      %v1203 = vrot.slane %v1194, %v1202
      %v1205 = vunpack.c.l.s4 1983009808
      %v1206 = vunpack.c.0.s8 %v1205
      %v1207 = vlaneseq
      %v1208 = vshrl.u32 %v1207, 7
      %v1209 = vsub.s32 %v1206, %v1208
      %v1210 = vrot.slane %v1196, %v1209
      %v1211 = vcombine.high %v1203, %v1203
      %1212 = vrot.lane.b32.xlu0 %v1203, 124
      %v1213 = vpop.permute.xlu0 %1212
      %1214 = vrot.lane.b32.xlu0 %v1211, 124
      %v1215 = vpop.permute.xlu0 %1214
      %1216 = vrot.lane.b32.xlu0 %v1210, 124
      %v1217 = vpop.permute.xlu0 %1216
      %vm1218 = vcmask 1014784
      %v1219 = vsel %vm1218, %v1213, %v1215
      %v1220 = vsel %vm1218, %v1215, %v1217
      %v1222 = vsel %vm498, %v470, 0
      %v1225 = vsel %vm502, %v1219, 0
      %v1228 = vsel %vm502, %v1220, 0
      %v1231 = vsel %vm502, %v1217, 0
      %1233 = vmatprep.subr.bf16.mxu0 %v1228
      %1234 = vmatpush1.bf16.msra.mxu0 %v1225
      %1235 = vmatprep.subr.bf16.mxu0 0
      %1236 = vmatpush1.bf16.msra.mxu0 0
      %1237 = vmatprep.subr.bf16.mxu0 0
      %1238 = vmatpush1.bf16.msra.mxu0 0
      %1239 = vmatprep.subr.bf16.mxu0 0
      %1240 = vmatpush1.bf16.msra.mxu0 0
      %1241 = vmatprep.subr.bf16.mxu0 0
      %1242 = vmatpush1.bf16.msra.mxu0 0
      %1243 = vmatprep.subr.bf16.mxu0 0
      %1244 = vmatpush1.bf16.msra.mxu0 0
      %1245 = vmatprep.subr.bf16.mxu0 0
      %1246 = vmatpush1.bf16.msra.mxu0 0
      %1247 = vmatprep.subr.bf16.mxu0 0
      %1248 = vmatpush1.bf16.msra.mxu0 0
      %1249 = vmatprep.subr.bf16.mxu0 0
      %1250 = vmatpush1.bf16.msra.mxu0 0
      %1251 = vmatprep.subr.bf16.mxu0 0
      %1252 = vmatpush1.bf16.msra.mxu0 0
      %1253 = vmatprep.subr.bf16.mxu0 0
      %1254 = vmatpush1.bf16.msra.mxu0 0
      %1255 = vmatprep.subr.bf16.mxu0 0
      %1256 = vmatpush1.bf16.msra.mxu0 0
      %1257 = vmatprep.subr.bf16.mxu0 0
      %1258 = vmatpush1.bf16.msra.mxu0 0
      %1259 = vmatprep.subr.bf16.mxu0 0
      %1260 = vmatpush1.bf16.msra.mxu0 0
      %1261 = vmatprep.subr.bf16.mxu0 0
      %1262 = vmatpush1.bf16.msra.mxu0 0
      %1263 = vmatprep.subr.bf16.mxu0 0
      %1264 = vmatpush1.bf16.msra.mxu0 0
      %1265 = vmatprep.mubr.bf16.mxu0 0
      %1266 = vmatmul.mubr.bf16.gmra.mrb[0].mxu0 %v1222
      %v1267 = vpop.f32.mrb[0].mxu0
      %v1268 = vadd.f32 0.0, %v1267
      %v1269 = vpop.f32.mrb[0].mxu0
      %v1270 = vadd.f32 0.0, %v1269
      %v1271 = vpop.f32.mrb[0].mxu0
      %v1272 = vpop.f32.mrb[0].mxu0
      %1273 = vdwg.mxu0
      %1274 = vmatprep.subr.bf16.mxu0 0
      %1275 = vmatpush1.bf16.msra.mxu0 %v1231
      %1276 = vmatprep.subr.bf16.mxu0 0
      %1277 = vmatpush1.bf16.msra.mxu0 0
      %1278 = vmatprep.subr.bf16.mxu0 0
      %1279 = vmatpush1.bf16.msra.mxu0 0
      %1280 = vmatprep.subr.bf16.mxu0 0
      %1281 = vmatpush1.bf16.msra.mxu0 0
      %1282 = vmatprep.subr.bf16.mxu0 0
      %1283 = vmatpush1.bf16.msra.mxu0 0
      %1284 = vmatprep.subr.bf16.mxu0 0
      %1285 = vmatpush1.bf16.msra.mxu0 0
      %1286 = vmatprep.subr.bf16.mxu0 0
      %1287 = vmatpush1.bf16.msra.mxu0 0
      %1288 = vmatprep.subr.bf16.mxu0 0
      %1289 = vmatpush1.bf16.msra.mxu0 0
      %1290 = vmatprep.subr.bf16.mxu0 0
      %1291 = vmatpush1.bf16.msra.mxu0 0
      %1292 = vmatprep.subr.bf16.mxu0 0
      %1293 = vmatpush1.bf16.msra.mxu0 0
      %1294 = vmatprep.subr.bf16.mxu0 0
      %1295 = vmatpush1.bf16.msra.mxu0 0
      %1296 = vmatprep.subr.bf16.mxu0 0
      %1297 = vmatpush1.bf16.msra.mxu0 0
      %1298 = vmatprep.subr.bf16.mxu0 0
      %1299 = vmatpush1.bf16.msra.mxu0 0
      %1300 = vmatprep.subr.bf16.mxu0 0
      %1301 = vmatpush1.bf16.msra.mxu0 0
      %1302 = vmatprep.subr.bf16.mxu0 0
      %1303 = vmatpush1.bf16.msra.mxu0 0
      %1304 = vmatprep.subr.bf16.mxu0 0
      %1305 = vmatpush1.bf16.msra.mxu0 0
      %1306 = vmatprep.mubr.bf16.mxu0 0
      %1307 = vmatmul.mubr.bf16.gmra.mrb[0].mxu0 %v1222
      %v1308 = vpop.f32.mrb[0].mxu0
      %v1309 = vadd.f32 0.0, %v1308
      %v1310 = vpop.f32.mrb[0].mxu0
      %v1311 = vpop.f32.mrb[0].mxu0
      %v1312 = vpop.f32.mrb[0].mxu0
      %1313 = vdwg.mxu0
      %v1314 = vadd.f32 %v1191, %v1268
      %v1315 = vadd.f32 %v1192, %v1270
      %v1316 = vadd.f32 %v1193, %v1309
      %s1317 = sld [smem:[#allocation5]]
      %v1318 = vstv %s1317
      %v1319 = vadd.f32 %v1318, %v1314
      %v1320 = vadd.f32 %v1318, %v1315
      %v1321 = vadd.f32 %v1318, %v1316
      %v1325 = vrot.slane %v1314, 1
      %v1326 = vrot.slane %v1315, 1
      %v1327 = vrot.slane %v1316, 1
      %1328 = vrot.lane.b32.xlu0 %v1325, 127
      %v1329 = vpop.permute.xlu0 %1328
      %1330 = vrot.lane.b32.xlu0 %v1326, 127
      %v1331 = vpop.permute.xlu0 %1330
      %1332 = vrot.lane.b32.xlu0 %v1327, 127
      %v1333 = vpop.permute.xlu0 %1332
      %vm1334 = vcmask 1039360
      %v1335 = vsel %vm1334, %v1329, %v1331
      %v1336 = vsel %vm1334, %v1331, %v1333
      %v1340 = vadd.f32 %v1319, %v1335
      %v1341 = vadd.f32 %v1320, %v1336
      %v1342 = vadd.f32 %v1321, %v1333
      %v1343 = vrot.slane %v1314, 2
      %v1344 = vrot.slane %v1315, 2
      %v1345 = vrot.slane %v1316, 2
      %1346 = vrot.lane.b32.xlu0 %v1343, 126
      %v1347 = vpop.permute.xlu0 %1346
      %1348 = vrot.lane.b32.xlu0 %v1344, 126
      %v1349 = vpop.permute.xlu0 %1348
      %1350 = vrot.lane.b32.xlu0 %v1345, 126
      %v1351 = vpop.permute.xlu0 %1350
      %vm1352 = vcmask 1031168
      %v1353 = vsel %vm1352, %v1347, %v1349
      %v1354 = vsel %vm1352, %v1349, %v1351
      %v1358 = vadd.f32 %v1340, %v1353
      %v1359 = vadd.f32 %v1341, %v1354
      %v1360 = vadd.f32 %v1342, %v1351
      %v1361 = vrot.slane %v1314, 3
      %v1362 = vrot.slane %v1315, 3
      %v1363 = vrot.slane %v1316, 3
      %1364 = vrot.lane.b32.xlu0 %v1361, 125
      %v1365 = vpop.permute.xlu0 %1364
      %1366 = vrot.lane.b32.xlu0 %v1362, 125
      %v1367 = vpop.permute.xlu0 %1366
      %1368 = vrot.lane.b32.xlu0 %v1363, 125
      %v1369 = vpop.permute.xlu0 %1368
      %vm1370 = vcmask 1022976
      %v1371 = vsel %vm1370, %v1365, %v1367
      %v1372 = vsel %vm1370, %v1367, %v1369
      %v1376 = vadd.f32 %v1358, %v1371
      %v1377 = vadd.f32 %v1359, %v1372
      %v1378 = vadd.f32 %v1360, %v1369
      %v1379 = vrot.slane %v1314, 4
      %v1380 = vrot.slane %v1315, 4
      %v1381 = vrot.slane %v1316, 4
      %1382 = vrot.lane.b32.xlu0 %v1379, 124
      %v1383 = vpop.permute.xlu0 %1382
      %1384 = vrot.lane.b32.xlu0 %v1380, 124
      %v1385 = vpop.permute.xlu0 %1384
      %1386 = vrot.lane.b32.xlu0 %v1381, 124
      %v1387 = vpop.permute.xlu0 %1386
      %vm1388 = vcmask 1014784
      %v1389 = vsel %vm1388, %v1383, %v1385
      %v1390 = vsel %vm1388, %v1385, %v1387
      %v1394 = vadd.f32 %v1376, %v1389
      %v1395 = vadd.f32 %v1377, %v1390
      %v1396 = vadd.f32 %v1378, %v1387
      %v1397 = vrot.slane %v1314, 5
      %v1398 = vrot.slane %v1315, 5
      %v1399 = vrot.slane %v1316, 5
      %1400 = vrot.lane.b32.xlu0 %v1397, 123
      %v1401 = vpop.permute.xlu0 %1400
      %1402 = vrot.lane.b32.xlu0 %v1398, 123
      %v1403 = vpop.permute.xlu0 %1402
      %1404 = vrot.lane.b32.xlu0 %v1399, 123
      %v1405 = vpop.permute.xlu0 %1404
      %vm1406 = vcmask 1006592
      %v1407 = vsel %vm1406, %v1401, %v1403
      %v1408 = vsel %vm1406, %v1403, %v1405
      %v1412 = vadd.f32 %v1394, %v1407
      %v1413 = vadd.f32 %v1395, %v1408
      %v1414 = vadd.f32 %v1396, %v1405
      %v1415 = vrot.slane %v1314, 6
      %v1416 = vrot.slane %v1315, 6
      %v1417 = vrot.slane %v1316, 6
      %1418 = vrot.lane.b32.xlu0 %v1415, 122
      %v1419 = vpop.permute.xlu0 %1418
      %1420 = vrot.lane.b32.xlu0 %v1416, 122
      %v1421 = vpop.permute.xlu0 %1420
      %1422 = vrot.lane.b32.xlu0 %v1417, 122
      %v1423 = vpop.permute.xlu0 %1422
      %vm1424 = vcmask 998400
      %v1425 = vsel %vm1424, %v1419, %v1421
      %v1426 = vsel %vm1424, %v1421, %v1423
      %v1430 = vadd.f32 %v1412, %v1425
      %v1431 = vadd.f32 %v1413, %v1426
      %v1432 = vadd.f32 %v1414, %v1423
      %v1433 = vxor.u32 %v1430, 2147483648
      %v1434 = vxor.u32 %v1431, 2147483648
      %v1435 = vxor.u32 %v1432, 2147483648
      %v1436 = vmul.f32 %v1433, 1.442695
      %v1437 = vpow.pop %v1436
      %v1438 = vmul.f32 %v1434, 1.442695
      %v1439 = vpow.pop %v1438
      %v1440 = vmul.f32 %v1435, 1.442695
      %v1441 = vpow.pop %v1440
      %v1442 = vadd.f32 %v1437, 1.0
      %v1443 = vadd.f32 %v1439, 1.0
      %v1444 = vadd.f32 %v1441, 1.0
      %v1445 = vrcp.pop %v1442
      %v1446 = vmul.f32 1.0, %v1445
      %v1447 = vrcp.pop %v1443
      %v1448 = vmul.f32 1.0, %v1447
      %v1449 = vrcp.pop %v1444
      %v1450 = vmul.f32 1.0, %v1449
      %v1454 = vcombine.low %v1446, %v1448
      %v1456 = vunpack.c.l.s4 1966171168
      %v1457 = vunpack.c.0.s8 %v1456
      %v1458 = vlaneseq
      %v1459 = vshrl.u32 %v1458, 7
      %v1460 = vsub.s32 %v1457, %v1459
      %v1461 = vrot.slane %v1454, %v1460
      %v1463 = vunpack.c.l.s4 1966171168
      %v1464 = vunpack.c.0.s8 %v1463
      %v1465 = vlaneseq
      %v1466 = vshrl.u32 %v1465, 7
      %v1467 = vsub.s32 %v1464, %v1466
      %v1468 = vrot.slane %v1450, %v1467
      %v1469 = vcombine.low %v1461, %v1468
      %v1471 = vunpack.c.l.s4 1966171168
      %v1472 = vunpack.c.0.s8 %v1471
      %v1473 = vlaneseq
      %v1474 = vshrl.u32 %v1473, 7
      %v1475 = vsub.s32 %v1472, %v1474
      %v1476 = vrot.slane %v1469, %v1475
      %v1478 = vlaneseq
      %vm1479 = vcmp.ge.s32.totalorder %v1478, 0
      %vm1480 = vcmp.lt.s32.totalorder %v1478, 352
      %vm1481 = vmand %vm1479, %vm1480
      %1482 = vst.msk [vmem:[#allocation3] sm:$0x7] %vm1481, %v1476
      %v1483 = vld [vmem:[#allocation3] sm:$0x1]
      %vm1484 = vcmp.lt.s32.totalorder %v1478, 16
      %vm1485 = vmand %vm1479, %vm1484
      %1486 = vst.msk [vmem:[#allocation4] sm:$0x1] %vm1485, %v1483
      %v1487 = vld [vmem:[#allocation3] sm:$0x1]
      %1489 = vrot.lane.b32.xlu0 %v1487, 122
      %v1490 = vpop.permute.xlu0 %1489
      %vm1492 = vcmp.ge.s32.totalorder %v1478, 16
      %vm1493 = vcmp.lt.s32.totalorder %v1478, 32
      %vm1494 = vmand %vm1492, %vm1493
      %1495 = vst.msk [vmem:[#allocation4] sm:$0x1] %vm1494, %v1490
      %v1496 = vld [vmem:[#allocation3] sm:$0x1]
      %1498 = vrot.lane.b32.xlu0 %v1496, 116
      %v1499 = vpop.permute.xlu0 %1498
      %vm1501 = vcmp.ge.s32.totalorder %v1478, 32
      %vm1502 = vcmp.lt.s32.totalorder %v1478, 48
      %vm1503 = vmand %vm1501, %vm1502
      %1504 = vst.msk [vmem:[#allocation4] sm:$0x1] %vm1503, %v1499
      %v1505 = vld [vmem:[#allocation3] sm:$0x1]
      %1507 = vrot.lane.b32.xlu0 %v1505, 110
      %v1508 = vpop.permute.xlu0 %1507
      %vm1510 = vcmp.ge.s32.totalorder %v1478, 48
      %vm1511 = vcmp.lt.s32.totalorder %v1478, 64
      %vm1512 = vmand %vm1510, %vm1511
      %1513 = vst.msk [vmem:[#allocation4] sm:$0x1] %vm1512, %v1508
      %v1514 = vld [vmem:[#allocation3] sm:$0x1]
      %1516 = vrot.lane.b32.xlu0 %v1514, 104
      %v1517 = vpop.permute.xlu0 %1516
      %vm1519 = vcmp.ge.s32.totalorder %v1478, 64
      %vm1520 = vcmp.lt.s32.totalorder %v1478, 80
      %vm1521 = vmand %vm1519, %vm1520
      %1522 = vst.msk [vmem:[#allocation4] sm:$0x1] %vm1521, %v1517
      %v1523 = vld [vmem:[#allocation3] sm:$0x1]
      %1525 = vrot.lane.b32.xlu0 %v1523, 98
      %v1526 = vpop.permute.xlu0 %1525
      %vm1528 = vcmp.ge.s32.totalorder %v1478, 80
      %vm1529 = vcmp.lt.s32.totalorder %v1478, 96
      %vm1530 = vmand %vm1528, %vm1529
      %1531 = vst.msk [vmem:[#allocation4] sm:$0x1] %vm1530, %v1526
      %v1532 = vld [vmem:[#allocation3 + $0x1] sm:$0x1]
      %1534 = vrot.lane.b32.xlu0 %v1532, 92
      %v1535 = vpop.permute.xlu0 %1534
      %vm1537 = vcmp.ge.s32.totalorder %v1478, 96
      %vm1538 = vcmp.lt.s32.totalorder %v1478, 112
      %vm1539 = vmand %vm1537, %vm1538
      %1540 = vst.msk [vmem:[#allocation4] sm:$0x1] %vm1539, %v1535
      %v1541 = vld [vmem:[#allocation3 + $0x1] sm:$0x1]
      %1543 = vrot.lane.b32.xlu0 %v1541, 86
      %v1544 = vpop.permute.xlu0 %1543
      %vm1546 = vcmp.ge.s32.totalorder %v1478, 112
      %vm1547 = vcmp.lt.s32.totalorder %v1478, 128
      %vm1548 = vmand %vm1546, %vm1547
      %1549 = vst.msk [vmem:[#allocation4] sm:$0x1] %vm1548, %v1544
      %v1550 = vld [vmem:[#allocation3 + $0x1] sm:$0x1]
      %1552 = vrot.lane.b32.xlu0 %v1550, 80
      %v1553 = vpop.permute.xlu0 %1552
      %1555 = vst.msk [vmem:[#allocation4 + $0x1] sm:$0x1] %vm1485, %v1553
      %v1556 = vld [vmem:[#allocation3 + $0x1] sm:$0x1]
      %1558 = vrot.lane.b32.xlu0 %v1556, 74
      %v1559 = vpop.permute.xlu0 %1558
      %1561 = vst.msk [vmem:[#allocation4 + $0x1] sm:$0x1] %vm1494, %v1559
      %v1562 = vld [vmem:[#allocation3 + $0x1] sm:$0x1]
      %1564 = vrot.lane.b32.xlu0 %v1562, 68
      %v1565 = vpop.permute.xlu0 %1564
      %1567 = vst.msk [vmem:[#allocation4 + $0x1] sm:$0x1] %vm1503, %v1565
      %v1568 = vld [vmem:[#allocation3 + $0x1] sm:$0x3]
      %1570 = vrot.lane.b32.xlu0 %v1568, 62
      %v1571 = vpop.permute.xlu0 %1570
      %v1572 = vrot.slane %v1571, 1
      %vm1573 = vcmask 506880
      %v1574 = vsel %vm1573, %v1571, %v1572
      %1576 = vst.msk [vmem:[#allocation4 + $0x1] sm:$0x1] %vm1512, %v1574
      %v1577 = vld [vmem:[#allocation3 + $0x2] sm:$0x1]
      %1579 = vrot.lane.b32.xlu0 %v1577, 56
      %v1580 = vpop.permute.xlu0 %1579
      %1582 = vst.msk [vmem:[#allocation4 + $0x1] sm:$0x1] %vm1521, %v1580
      %v1583 = vld [vmem:[#allocation3 + $0x2] sm:$0x1]
      %1585 = vrot.lane.b32.xlu0 %v1583, 50
      %v1586 = vpop.permute.xlu0 %1585
      %1588 = vst.msk [vmem:[#allocation4 + $0x1] sm:$0x1] %vm1530, %v1586
      %v1589 = vld [vmem:[#allocation3 + $0x2] sm:$0x1]
      %1591 = vrot.lane.b32.xlu0 %v1589, 44
      %v1592 = vpop.permute.xlu0 %1591
      %1594 = vst.msk [vmem:[#allocation4 + $0x1] sm:$0x1] %vm1539, %v1592
      %v1595 = vld [vmem:[#allocation3 + $0x2] sm:$0x1]
      %1597 = vrot.lane.b32.xlu0 %v1595, 38
      %v1598 = vpop.permute.xlu0 %1597
      %1600 = vst.msk [vmem:[#allocation4 + $0x1] sm:$0x1] %vm1548, %v1598
      %v1601 = vld [vmem:[%s166] sm:$0xff]
      %v1602 = vld [vmem:[#allocation4] sm:$0x3]
      %v1604 = vlaneseq
      %v1605 = vshrl.u32 %v1604, 7
      %v1606 = vsub.s32 0, %v1605
      %v1607 = vrot.slane %v1602, %v1606
      %v1608 = vlaneseq
      %v1609 = vshrl.u32 %v1608, 7
      %v1610 = vsub.s32 1, %v1609
      %v1611 = vrot.slane %v1602, %v1610
      %v1612 = vcombine.low %v1607, %v1611
      %v1614 = vmul.f32 %v1601, %v1612
      %1615 = vst [vmem:[%s171] sm:$0xff] %v1614
      %p1616 = scmp.lt.s32.totalorder %s15, 1
      %s1617 = scalar_select %p1616, %s15, 1
      %s1618 = smul.addr %s1617, 2
      %s1619 = smul.addr %s1618, 4
      %s1620 = scalar_lea.vmem %s3, %s1619
      // Predicated region
      $region33: #{spatial_attention.1} parent=31 // pred_check
        %p1621 = pneg %p101
      $region34: #{spatial_attention.1} parent=31 // pred_check_branch
        %1623 = sbr.rel (%p1621) target = $region36
      $region35: #{spatial_attention.1} parent=31 // pred_region
        _
      $region36: #{spatial_attention.1} parent=31 // pred_fallthru
        _
    $region32: #{spatial_attention.1} parent=5 // pred_fallthru
      _
    %p1624 = scmp.le.s32.totalorder 2, %s10
    // Predicated region
    $region37: #{spatial_attention.1} parent=5 // pred_check
      %p1625 = pneg %p1624
    $region38: #{spatial_attention.1} parent=5 // pred_check_branch
      %1627 = sbr.rel (%p1625) target = $region40
    $region39: #{spatial_attention.1} parent=5 // pred_region
      %s1628 = ssub.s32 %s10, 2
      // Predicated region
      $region41: #{spatial_attention.1} parent=39 // pred_check
        %p1629 = pneg %p107
      $region42: #{spatial_attention.1} parent=39 // pred_check_branch
        %1631 = sbr.rel (%p1629) target = $region44
      $region43: #{spatial_attention.1} parent=39 // pred_region
        %p1632 = scmp.lt.s32.totalorder %s16, 1
        %s1633 = scalar_select %p1632, %s16, 1
        %s1634 = smul.addr %s1633, 2
        %s1635 = smul.addr %s1634, 4
        %s1636 = scalar_lea.vmem %s3, %s1635
      $region44: #{spatial_attention.1} parent=39 // pred_fallthru
        _
    $region40: #{spatial_attention.1} parent=5 // pred_fallthru
      _
  $region6: #{spatial_attention.1} parent=0 // loop_footer
    %s14 = sadd.s32 1, %s10
  $region7: #{spatial_attention.1} parent=0 // loop_footer_branch
    %9 = sbr.rel target = $region3
  $region8: #{spatial_attention.1} parent=0 // loop_exit
    _

</llo_original>
